<compile_context>
chip_gen: v5e
topology: v5e:2x2
jax: 0.10.0
libtpu: 0.0.40
codegen_flags: <defaults>
</compile_context>

<pallas_src>
import functools

import numpy as np

import jax
import jax.numpy as jnp
from jax.experimental import pallas as pl
from jax.experimental.pallas import tpu as pltpu


# ----------------------------------------------------------------------------
# Fused Pallas kernel: one grid step processes a whole batch tile (tb samples).
# ----------------------------------------------------------------------------
def _cnn_fused_kernel(p1_ref, g2_ref, w1_ref, b1_ref, w2_ref, b2_ref,
                      wfc1_ref, bfc1_ref, wfc2_ref, bfc2_ref, *rest,
                      tb, hw1, qp, n_sup):
    if n_sup > 0:
        wfc3_ref, bfc3_ref, q_ref, s_ref, p2_scr, flat_scr = rest
    else:
        q_ref, p2_scr, flat_scr = rest

    c1 = w1_ref.shape[0]          # conv1 out channels (16)
    c2 = w2_ref.shape[0]          # conv2 out channels (16)

    # ---- conv1 + ReLU: ONE matmul over all tb samples (N = tb*hw1 lanes) -----
    # p1 is the conv1 im2col patch matrix (9*cin, tb*hw1) built in the wrapper.
    a1 = jnp.maximum(
        jnp.dot(w1_ref[...], p1_ref[...], preferred_element_type=jnp.float32)
        + b1_ref[...], 0.0)                                       # (c1, tb*hw1)

    # ---- conv2 im2col: precomputed one-hot gather (MXU) + aligned copies -----
    # g2[src, t*qp + q] == 1 iff flat source position `src` feeds tap t at output
    # position q (stride 2).  ag therefore holds all 9 tap patches side by side.
    for b in range(tb):                                           # static, tb small
        ag = jnp.dot(a1[:, b * hw1:(b + 1) * hw1], g2_ref[...],
                     preferred_element_type=jnp.float32)          # (c1, 9*qp)
        for t in range(9):
            p2_scr[t * c1:(t + 1) * c1, b * qp:(b + 1) * qp] = (
                ag[:, t * qp:(t + 1) * qp])

    # ---- conv2 + ReLU: ONE matmul, K = 9*c1 = 144, N = tb*qp ------------------
    a2 = jnp.maximum(
        jnp.dot(w2_ref[...], p2_scr[...], preferred_element_type=jnp.float32)
        + b2_ref[...], 0.0)                                       # (c2, tb*qp)

    # ---- flatten (PyTorch NCHW order) into (tb, c2*qp) rows -------------------
    # fc1 weight rows were lane-padded to qp per channel offline (padding rows are
    # zero), so copying the full qp-lane blocks (including the relu(b2) padding
    # lanes) is exact.
    for b in range(tb):
        for c in range(c2):
            flat_scr[b:b + 1, c * qp:(c + 1) * qp] = (
                a2[c:c + 1, b * qp:(b + 1) * qp])

    # ---- fc1 + ReLU, fc2 (+ optional fc3): single matmuls over the batch tile -
    h = jnp.maximum(
        jnp.dot(flat_scr[...], wfc1_ref[...], preferred_element_type=jnp.float32)
        + bfc1_ref[...], 0.0)                                     # (tb, 256)
    q_ref[...] = (jnp.dot(h, wfc2_ref[...], preferred_element_type=jnp.float32)
                  + bfc2_ref[...]).astype(q_ref.dtype)
    if n_sup > 0:
        s_ref[...] = (jnp.dot(h, wfc3_ref[...], preferred_element_type=jnp.float32)
                      + bfc3_ref[...]).astype(s_ref.dtype)


# ----------------------------------------------------------------------------
# Parameters (deterministic, PyTorch-like uniform fan-in init; PyTorch layouts)
# ----------------------------------------------------------------------------
def init_params(key, input_shape, n_actions, sup=0):
    cin, H, W = input_shape
    ks = jax.random.split(key, 10)

    def u(k, shape, fan_in):
        bound = 1.0 / jnp.sqrt(float(fan_in))
        return jax.random.uniform(k, shape, jnp.float32, -bound, bound)

    params = {
        "w1": u(ks[0], (3, 3, cin, 16), 3 * 3 * cin),       # HWIO
        "b1": u(ks[1], (16,), 3 * 3 * cin),
        "w2": u(ks[2], (3, 3, 16, 16), 3 * 3 * 16),
        "b2": u(ks[3], (16,), 3 * 3 * 16),
    }
    H2, W2 = (H - 3) // 2 + 1, (W - 3) // 2 + 1
    fc1_in = 16 * H2 * W2                                    # rows in (c, h, w) order
    params["w_fc1"] = u(ks[4], (fc1_in, 256), fc1_in)
    params["b_fc1"] = u(ks[5], (256,), fc1_in)
    params["w_fc2"] = u(ks[6], (256, n_actions), 256)
    params["b_fc2"] = u(ks[7], (n_actions,), 256)
    if sup > 0:
        params["w_fc3"] = u(ks[8], (256, sup), 256)
        params["b_fc3"] = u(ks[9], (sup,), 256)
    return params


def _qpad(hw2):
    """Lane padding per conv2-output / flatten channel block (multiple of 64)."""
    return ((hw2 + 63) // 64) * 64


def prepare_params(params, input_shape):
    """One-time (offline) conversion of PyTorch-layout params into kernel layout."""
    C, H, W = input_shape
    H2, W2 = (H - 3) // 2 + 1, (W - 3) // 2 + 1
    HW2 = H2 * W2
    c1 = params["w1"].shape[3]
    c2 = params["w2"].shape[3]
    nh = params["w_fc1"].shape[1]
    qp = _qpad(HW2)

    # Conv weights flattened for single im2col matmuls: [cout, tap*cin].
    w1f = np.asarray(params["w1"]).reshape(9, C, c1).transpose(2, 0, 1).reshape(c1, 9 * C)
    w2f = np.asarray(params["w2"]).reshape(9, c1, c2).transpose(2, 0, 1).reshape(c2, 9 * c1)

    # Precomputed conv2 (stride-2) im2col gather matrix: exact one-hot, built once.
    q = np.arange(HW2)
    p2pos = (q // W2) * (2 * W) + (q % W2) * 2               # flat index of tap (0,0)
    g2 = np.zeros((H * W, 9 * qp), np.float32)
    for t in range(9):
        kh, kw = divmod(t, 3)
        g2[p2pos + kh * W + kw, t * qp + q] = 1.0

    # fc1 weight: PyTorch flatten order (c, h, w); lane-pad each channel block to qp.
    wfc1 = np.zeros((c2, qp, nh), np.float32)
    wfc1[:, :HW2, :] = np.asarray(params["w_fc1"]).reshape(c2, HW2, nh)

    kp = {
        "w1f": jnp.asarray(w1f),
        "b1": jnp.asarray(params["b1"]).reshape(c1, 1),
        "w2f": jnp.asarray(w2f),
        "b2": jnp.asarray(params["b2"]).reshape(c2, 1),
        "g2": jnp.asarray(g2),
        "wfc1": jnp.asarray(wfc1.reshape(c2 * qp, nh)),
        "bfc1": jnp.asarray(params["b_fc1"]).reshape(1, nh),
        "wfc2": jnp.asarray(params["w_fc2"]),
        "bfc2": jnp.asarray(params["b_fc2"]).reshape(1, -1),
    }
    if "w_fc3" in params:
        kp["wfc3"] = jnp.asarray(params["w_fc3"])
        kp["bfc3"] = jnp.asarray(params["b_fc3"]).reshape(1, -1)
    return kp


# ----------------------------------------------------------------------------
# Forward pass (matches CNN.forward)
# ----------------------------------------------------------------------------
def cnn_forward(kparams, state_nchw, *, input_shape, n_actions, sup=0):
    B = state_nchw.shape[0]
    C, H, W = input_shape
    H2, W2 = (H - 3) // 2 + 1, (W - 3) // 2 + 1
    HW1, HW2 = H * W, H2 * W2
    qp = _qpad(HW2)
    c1 = kparams["w1f"].shape[0]
    c2 = kparams["w2f"].shape[0]
    nh = kparams["wfc1"].shape[1]

    # Batch tiling: one grid step handles a whole tile (all samples for small B).
    TB = B if B <= 8 else 8
    assert B % TB == 0, "batch must be divisible by the batch tile"
    nb = B // TB

    # Tiny wrapper glue (~70 KB): zero-pad + conv1 im2col -> (9*C, B*HW1).
    xpad = jnp.pad(state_nchw, ((0, 0), (0, 0), (1, 1), (1, 1)))
    taps = jnp.stack([xpad[:, :, kh:kh + H, kw:kw + W]
                      for kh in range(3) for kw in range(3)], axis=0)  # (9,B,C,H,W)
    p1 = taps.transpose(0, 2, 1, 3, 4).reshape(9 * C, B * HW1)

    kern = functools.partial(_cnn_fused_kernel, tb=TB, hw1=HW1, qp=qp, n_sup=sup)

    in_specs = [
        pl.BlockSpec((9 * C, TB * HW1), lambda g: (0, g)),     # conv1 patches (per tile)
        pl.BlockSpec((HW1, 9 * qp), lambda g: (0, 0)),         # conv2 one-hot gather
        pl.BlockSpec((c1, 9 * C), lambda g: (0, 0)),           # conv1 weight
        pl.BlockSpec((c1, 1), lambda g: (0, 0)),               # conv1 bias
        pl.BlockSpec((c2, 9 * c1), lambda g: (0, 0)),          # conv2 weight
        pl.BlockSpec((c2, 1), lambda g: (0, 0)),               # conv2 bias
        pl.BlockSpec((c2 * qp, nh), lambda g: (0, 0)),         # fc1 weight (lane-padded rows)
        pl.BlockSpec((1, nh), lambda g: (0, 0)),               # fc1 bias
        pl.BlockSpec((nh, n_actions), lambda g: (0, 0)),       # fc2 weight
        pl.BlockSpec((1, n_actions), lambda g: (0, 0)),        # fc2 bias
    ]
    args = [p1, kparams["g2"], kparams["w1f"], kparams["b1"], kparams["w2f"],
            kparams["b2"], kparams["wfc1"], kparams["bfc1"], kparams["wfc2"],
            kparams["bfc2"]]
    out_shape = [jax.ShapeDtypeStruct((B, n_actions), jnp.float32)]
    out_specs = [pl.BlockSpec((TB, n_actions), lambda g: (g, 0))]
    if sup > 0:
        in_specs += [pl.BlockSpec((nh, sup), lambda g: (0, 0)),
                     pl.BlockSpec((1, sup), lambda g: (0, 0))]
        args += [kparams["wfc3"], kparams["bfc3"]]
        out_shape.append(jax.ShapeDtypeStruct((B, sup), jnp.float32))
        out_specs.append(pl.BlockSpec((TB, sup), lambda g: (g, 0)))

    outs = pl.pallas_call(
        kern,
        grid=(nb,),                       # nb == 1 for small B: one step, whole batch
        in_specs=in_specs,
        out_specs=out_specs,
        out_shape=out_shape,
        scratch_shapes=[pltpu.VMEM((9 * c1, TB * qp), jnp.float32),   # conv2 patches
                        pltpu.VMEM((TB, c2 * qp), jnp.float32)],      # flattened acts
        compiler_params=pltpu.CompilerParams(
            dimension_semantics=("parallel",)),   # batch tiles split across TCs if nb > 1
    )(*args)

    if sup > 0:
        return outs[0], outs[1]
    return outs[0]


# ----------------------------------------------------------------------------
# Pure-JAX reference (PyTorch semantics; for correctness check only)
# ----------------------------------------------------------------------------
def reference_forward(params, state_nchw):
    dn = ("NHWC", "HWIO", "NHWC")
    x = jnp.transpose(state_nchw, (0, 2, 3, 1))
    x = jax.lax.conv_general_dilated(x, params["w1"], (1, 1), ((1, 1), (1, 1)),
                                     dimension_numbers=dn) + params["b1"]
    x = jnp.maximum(x, 0.0)
    x = jax.lax.conv_general_dilated(x, params["w2"], (2, 2), ((0, 0), (0, 0)),
                                     dimension_numbers=dn) + params["b2"]
    x = jnp.maximum(x, 0.0)
    B = x.shape[0]
    x = jnp.transpose(x, (0, 3, 1, 2)).reshape(B, -1)        # NCHW flatten order
    h = jnp.maximum(x @ params["w_fc1"] + params["b_fc1"], 0.0)
    return h @ params["w_fc2"] + params["b_fc2"]


if __name__ == "__main__":
    batch = 2
    input_shape = (4, 16, 16)        # (C, H, W), PyTorch convention
    n_actions = 6
    sup = 0

    key = jax.random.PRNGKey(0)
    pkey, xkey = jax.random.split(key)
    params = init_params(pkey, input_shape, n_actions, sup=sup)
    kparams = prepare_params(params, input_shape)            # one-time layout prep
    state = jax.random.normal(xkey, (batch,) + input_shape, jnp.float32)

    fwd = jax.jit(functools.partial(cnn_forward, input_shape=input_shape,
                                    n_actions=n_actions, sup=sup))
    q = fwd(kparams, state)
    q = jax.block_until_ready(q)
    assert q.shape == (batch, n_actions), q.shape

    q_ref = reference_forward(params, state)
    max_err = float(jnp.max(jnp.abs(q - q_ref)))
    assert jnp.allclose(q, q_ref, atol=2e-4, rtol=2e-4), f"max_err={max_err}"

    print("KERNEL_OK")
</pallas_src>

<mosaic_0001>
module attributes {stable_mosaic.version = 11 : i64} {
  func.func @_cnn_fused_kernel(%arg0: i32, %arg1: memref<36x512xf32, #tpu.memory_space<vmem>>, %arg2: memref<256x576xf32, #tpu.memory_space<vmem>>, %arg3: memref<16x36xf32, #tpu.memory_space<vmem>>, %arg4: memref<16x1xf32, #tpu.memory_space<vmem>>, %arg5: memref<16x144xf32, #tpu.memory_space<vmem>>, %arg6: memref<16x1xf32, #tpu.memory_space<vmem>>, %arg7: memref<1024x256xf32, #tpu.memory_space<vmem>>, %arg8: memref<1x256xf32, #tpu.memory_space<vmem>>, %arg9: memref<256x6xf32, #tpu.memory_space<vmem>>, %arg10: memref<1x6xf32, #tpu.memory_space<vmem>>, %arg11: memref<2x6xf32, #tpu.memory_space<vmem>>, %arg12: memref<144x128xf32, #tpu.memory_space<vmem>>, %arg13: memref<2x1024xf32, #tpu.memory_space<vmem>>) attributes {dimension_semantics = [#tpu.dimension_semantics<parallel>], iteration_bounds = array<i64: 1>, scalar_prefetch = 0 : i64, scratch_operands = 2 : i64, tpu.core_type = #tpu.core_type<tc>, window_params = [{transform_indices = @transform_0, window_bounds = array<i64: 36, 512>}, {pipeline_mode = #tpu.pipeline_mode<synchronous>, transform_indices = @transform_1, window_bounds = array<i64: 256, 576>}, {pipeline_mode = #tpu.pipeline_mode<synchronous>, transform_indices = @transform_2, window_bounds = array<i64: 16, 36>}, {pipeline_mode = #tpu.pipeline_mode<synchronous>, transform_indices = @transform_3, window_bounds = array<i64: 16, 1>}, {pipeline_mode = #tpu.pipeline_mode<synchronous>, transform_indices = @transform_4, window_bounds = array<i64: 16, 144>}, {pipeline_mode = #tpu.pipeline_mode<synchronous>, transform_indices = @transform_5, window_bounds = array<i64: 16, 1>}, {pipeline_mode = #tpu.pipeline_mode<synchronous>, transform_indices = @transform_6, window_bounds = array<i64: 1024, 256>}, {pipeline_mode = #tpu.pipeline_mode<synchronous>, transform_indices = @transform_7, window_bounds = array<i64: 1, 256>}, {pipeline_mode = #tpu.pipeline_mode<synchronous>, transform_indices = @transform_8, window_bounds = array<i64: 256, 6>}, {pipeline_mode = #tpu.pipeline_mode<synchronous>, transform_indices = @transform_9, window_bounds = array<i64: 1, 6>}, {transform_indices = @transform_10, window_bounds = array<i64: 2, 6>}]} {
    %c0 = arith.constant 0 : index
    %c0_0 = arith.constant 0 : index
    %0 = vector.load %arg3[%c0, %c0_0] : memref<16x36xf32, #tpu.memory_space<vmem>>, vector<16x36xf32>
    %c0_1 = arith.constant 0 : index
    %c0_2 = arith.constant 0 : index
    %1 = vector.load %arg1[%c0_1, %c0_2] : memref<36x512xf32, #tpu.memory_space<vmem>>, vector<36x512xf32>
    %cst = arith.constant dense<0.000000e+00> : vector<16x512xf32>
    %2 = tpu.matmul %0, %1, %cst {dimension_numbers = #tpu.dot_dimension_numbers<[1], [0], [0], [1], [0, 0, 1, 1], [], []>} : vector<16x36xf32>, vector<36x512xf32>, vector<16x512xf32> -> vector<16x512xf32>
    %c0_3 = arith.constant 0 : index
    %c0_4 = arith.constant 0 : index
    %3 = vector.load %arg4[%c0_3, %c0_4] : memref<16x1xf32, #tpu.memory_space<vmem>>, vector<16x1xf32>
    %4 = vector.broadcast %3 : vector<16x1xf32> to vector<16x512xf32>
    %5 = arith.addf %2, %4 : vector<16x512xf32>
    %cst_5 = arith.constant 0.000000e+00 : f32
    %6 = vector.broadcast %cst_5 : f32 to vector<16x512xf32>
    %7 = arith.maximumf %5, %6 : vector<16x512xf32>
    %8 = vector.extract_strided_slice %7 {offsets = [0, 0], sizes = [16, 256], strides = [1, 1]} : vector<16x512xf32> to vector<16x256xf32>
    %c0_6 = arith.constant 0 : index
    %c0_7 = arith.constant 0 : index
    %9 = vector.load %arg2[%c0_6, %c0_7] : memref<256x576xf32, #tpu.memory_space<vmem>>, vector<256x576xf32>
    %cst_8 = arith.constant dense<0.000000e+00> : vector<16x576xf32>
    %10 = tpu.matmul %8, %9, %cst_8 {dimension_numbers = #tpu.dot_dimension_numbers<[1], [0], [0], [1], [0, 0, 1, 1], [], []>} : vector<16x256xf32>, vector<256x576xf32>, vector<16x576xf32> -> vector<16x576xf32>
    %11 = vector.extract_strided_slice %10 {offsets = [0, 0], sizes = [16, 64], strides = [1, 1]} : vector<16x576xf32> to vector<16x64xf32>
    %c0_9 = arith.constant 0 : index
    %c0_10 = arith.constant 0 : index
    %12 = vector.load %arg12[%c0_9, %c0_10] : memref<144x128xf32, #tpu.memory_space<vmem>>, vector<16x64xf32>
    tpu.vector_store %arg12[%c0_9, %c0_10], %11 {strides = array<i32>} : memref<144x128xf32, #tpu.memory_space<vmem>>, vector<16x64xf32>,
    %13 = vector.extract_strided_slice %10 {offsets = [0, 64], sizes = [16, 64], strides = [1, 1]} : vector<16x576xf32> to vector<16x64xf32>
    %c16 = arith.constant 16 : index
    %c0_11 = arith.constant 0 : index
    %14 = vector.load %arg12[%c16, %c0_11] : memref<144x128xf32, #tpu.memory_space<vmem>>, vector<16x64xf32>
    tpu.vector_store %arg12[%c16, %c0_11], %13 {strides = array<i32>} : memref<144x128xf32, #tpu.memory_space<vmem>>, vector<16x64xf32>,
    %15 = vector.extract_strided_slice %10 {offsets = [0, 128], sizes = [16, 64], strides = [1, 1]} : vector<16x576xf32> to vector<16x64xf32>
    %c32 = arith.constant 32 : index
    %c0_12 = arith.constant 0 : index
    %16 = vector.load %arg12[%c32, %c0_12] : memref<144x128xf32, #tpu.memory_space<vmem>>, vector<16x64xf32>
    tpu.vector_store %arg12[%c32, %c0_12], %15 {strides = array<i32>} : memref<144x128xf32, #tpu.memory_space<vmem>>, vector<16x64xf32>,
    %17 = vector.extract_strided_slice %10 {offsets = [0, 192], sizes = [16, 64], strides = [1, 1]} : vector<16x576xf32> to vector<16x64xf32>
    %c48 = arith.constant 48 : index
    %c0_13 = arith.constant 0 : index
    %18 = vector.load %arg12[%c48, %c0_13] : memref<144x128xf32, #tpu.memory_space<vmem>>, vector<16x64xf32>
    tpu.vector_store %arg12[%c48, %c0_13], %17 {strides = array<i32>} : memref<144x128xf32, #tpu.memory_space<vmem>>, vector<16x64xf32>,
    %19 = vector.extract_strided_slice %10 {offsets = [0, 256], sizes = [16, 64], strides = [1, 1]} : vector<16x576xf32> to vector<16x64xf32>
    %c64 = arith.constant 64 : index
    %c0_14 = arith.constant 0 : index
    %20 = vector.load %arg12[%c64, %c0_14] : memref<144x128xf32, #tpu.memory_space<vmem>>, vector<16x64xf32>
    tpu.vector_store %arg12[%c64, %c0_14], %19 {strides = array<i32>} : memref<144x128xf32, #tpu.memory_space<vmem>>, vector<16x64xf32>,
    %21 = vector.extract_strided_slice %10 {offsets = [0, 320], sizes = [16, 64], strides = [1, 1]} : vector<16x576xf32> to vector<16x64xf32>
    %c80 = arith.constant 80 : index
    %c0_15 = arith.constant 0 : index
    %22 = vector.load %arg12[%c80, %c0_15] : memref<144x128xf32, #tpu.memory_space<vmem>>, vector<16x64xf32>
    tpu.vector_store %arg12[%c80, %c0_15], %21 {strides = array<i32>} : memref<144x128xf32, #tpu.memory_space<vmem>>, vector<16x64xf32>,
    %23 = vector.extract_strided_slice %10 {offsets = [0, 384], sizes = [16, 64], strides = [1, 1]} : vector<16x576xf32> to vector<16x64xf32>
    %c96 = arith.constant 96 : index
    %c0_16 = arith.constant 0 : index
    %24 = vector.load %arg12[%c96, %c0_16] : memref<144x128xf32, #tpu.memory_space<vmem>>, vector<16x64xf32>
    tpu.vector_store %arg12[%c96, %c0_16], %23 {strides = array<i32>} : memref<144x128xf32, #tpu.memory_space<vmem>>, vector<16x64xf32>,
    %25 = vector.extract_strided_slice %10 {offsets = [0, 448], sizes = [16, 64], strides = [1, 1]} : vector<16x576xf32> to vector<16x64xf32>
    %c112 = arith.constant 112 : index
    %c0_17 = arith.constant 0 : index
    %26 = vector.load %arg12[%c112, %c0_17] : memref<144x128xf32, #tpu.memory_space<vmem>>, vector<16x64xf32>
    tpu.vector_store %arg12[%c112, %c0_17], %25 {strides = array<i32>} : memref<144x128xf32, #tpu.memory_space<vmem>>, vector<16x64xf32>,
    %27 = vector.extract_strided_slice %10 {offsets = [0, 512], sizes = [16, 64], strides = [1, 1]} : vector<16x576xf32> to vector<16x64xf32>
    %c128 = arith.constant 128 : index
    %c0_18 = arith.constant 0 : index
    %28 = vector.load %arg12[%c128, %c0_18] : memref<144x128xf32, #tpu.memory_space<vmem>>, vector<16x64xf32>
    tpu.vector_store %arg12[%c128, %c0_18], %27 {strides = array<i32>} : memref<144x128xf32, #tpu.memory_space<vmem>>, vector<16x64xf32>,
    %29 = vector.extract_strided_slice %7 {offsets = [0, 256], sizes = [16, 256], strides = [1, 1]} : vector<16x512xf32> to vector<16x256xf32>
    %c0_19 = arith.constant 0 : index
    %c0_20 = arith.constant 0 : index
    %30 = vector.load %arg2[%c0_19, %c0_20] : memref<256x576xf32, #tpu.memory_space<vmem>>, vector<256x576xf32>
    %cst_21 = arith.constant dense<0.000000e+00> : vector<16x576xf32>
    %31 = tpu.matmul %29, %30, %cst_21 {dimension_numbers = #tpu.dot_dimension_numbers<[1], [0], [0], [1], [0, 0, 1, 1], [], []>} : vector<16x256xf32>, vector<256x576xf32>, vector<16x576xf32> -> vector<16x576xf32>
    %32 = vector.extract_strided_slice %31 {offsets = [0, 0], sizes = [16, 64], strides = [1, 1]} : vector<16x576xf32> to vector<16x64xf32>
    %c0_22 = arith.constant 0 : index
    %c64_23 = arith.constant 64 : index
    %33 = vector.load %arg12[%c0_22, %c64_23] : memref<144x128xf32, #tpu.memory_space<vmem>>, vector<16x64xf32>
    tpu.vector_store %arg12[%c0_22, %c64_23], %32 {strides = array<i32>} : memref<144x128xf32, #tpu.memory_space<vmem>>, vector<16x64xf32>,
    %34 = vector.extract_strided_slice %31 {offsets = [0, 64], sizes = [16, 64], strides = [1, 1]} : vector<16x576xf32> to vector<16x64xf32>
    %c16_24 = arith.constant 16 : index
    %c64_25 = arith.constant 64 : index
    %35 = vector.load %arg12[%c16_24, %c64_25] : memref<144x128xf32, #tpu.memory_space<vmem>>, vector<16x64xf32>
    tpu.vector_store %arg12[%c16_24, %c64_25], %34 {strides = array<i32>} : memref<144x128xf32, #tpu.memory_space<vmem>>, vector<16x64xf32>,
    %36 = vector.extract_strided_slice %31 {offsets = [0, 128], sizes = [16, 64], strides = [1, 1]} : vector<16x576xf32> to vector<16x64xf32>
    %c32_26 = arith.constant 32 : index
    %c64_27 = arith.constant 64 : index
    %37 = vector.load %arg12[%c32_26, %c64_27] : memref<144x128xf32, #tpu.memory_space<vmem>>, vector<16x64xf32>
    tpu.vector_store %arg12[%c32_26, %c64_27], %36 {strides = array<i32>} : memref<144x128xf32, #tpu.memory_space<vmem>>, vector<16x64xf32>,
    %38 = vector.extract_strided_slice %31 {offsets = [0, 192], sizes = [16, 64], strides = [1, 1]} : vector<16x576xf32> to vector<16x64xf32>
    %c48_28 = arith.constant 48 : index
    %c64_29 = arith.constant 64 : index
    %39 = vector.load %arg12[%c48_28, %c64_29] : memref<144x128xf32, #tpu.memory_space<vmem>>, vector<16x64xf32>
    tpu.vector_store %arg12[%c48_28, %c64_29], %38 {strides = array<i32>} : memref<144x128xf32, #tpu.memory_space<vmem>>, vector<16x64xf32>,
    %40 = vector.extract_strided_slice %31 {offsets = [0, 256], sizes = [16, 64], strides = [1, 1]} : vector<16x576xf32> to vector<16x64xf32>
    %c64_30 = arith.constant 64 : index
    %c64_31 = arith.constant 64 : index
    %41 = vector.load %arg12[%c64_30, %c64_31] : memref<144x128xf32, #tpu.memory_space<vmem>>, vector<16x64xf32>
    tpu.vector_store %arg12[%c64_30, %c64_31], %40 {strides = array<i32>} : memref<144x128xf32, #tpu.memory_space<vmem>>, vector<16x64xf32>,
    %42 = vector.extract_strided_slice %31 {offsets = [0, 320], sizes = [16, 64], strides = [1, 1]} : vector<16x576xf32> to vector<16x64xf32>
    %c80_32 = arith.constant 80 : index
    %c64_33 = arith.constant 64 : index
    %43 = vector.load %arg12[%c80_32, %c64_33] : memref<144x128xf32, #tpu.memory_space<vmem>>, vector<16x64xf32>
    tpu.vector_store %arg12[%c80_32, %c64_33], %42 {strides = array<i32>} : memref<144x128xf32, #tpu.memory_space<vmem>>, vector<16x64xf32>,
    %44 = vector.extract_strided_slice %31 {offsets = [0, 384], sizes = [16, 64], strides = [1, 1]} : vector<16x576xf32> to vector<16x64xf32>
    %c96_34 = arith.constant 96 : index
    %c64_35 = arith.constant 64 : index
    %45 = vector.load %arg12[%c96_34, %c64_35] : memref<144x128xf32, #tpu.memory_space<vmem>>, vector<16x64xf32>
    tpu.vector_store %arg12[%c96_34, %c64_35], %44 {strides = array<i32>} : memref<144x128xf32, #tpu.memory_space<vmem>>, vector<16x64xf32>,
    %46 = vector.extract_strided_slice %31 {offsets = [0, 448], sizes = [16, 64], strides = [1, 1]} : vector<16x576xf32> to vector<16x64xf32>
    %c112_36 = arith.constant 112 : index
    %c64_37 = arith.constant 64 : index
    %47 = vector.load %arg12[%c112_36, %c64_37] : memref<144x128xf32, #tpu.memory_space<vmem>>, vector<16x64xf32>
    tpu.vector_store %arg12[%c112_36, %c64_37], %46 {strides = array<i32>} : memref<144x128xf32, #tpu.memory_space<vmem>>, vector<16x64xf32>,
    %48 = vector.extract_strided_slice %31 {offsets = [0, 512], sizes = [16, 64], strides = [1, 1]} : vector<16x576xf32> to vector<16x64xf32>
    %c128_38 = arith.constant 128 : index
    %c64_39 = arith.constant 64 : index
    %49 = vector.load %arg12[%c128_38, %c64_39] : memref<144x128xf32, #tpu.memory_space<vmem>>, vector<16x64xf32>
    tpu.vector_store %arg12[%c128_38, %c64_39], %48 {strides = array<i32>} : memref<144x128xf32, #tpu.memory_space<vmem>>, vector<16x64xf32>,
    %c0_40 = arith.constant 0 : index
    %c0_41 = arith.constant 0 : index
    %50 = vector.load %arg5[%c0_40, %c0_41] : memref<16x144xf32, #tpu.memory_space<vmem>>, vector<16x144xf32>
    %c0_42 = arith.constant 0 : index
    %c0_43 = arith.constant 0 : index
    %51 = vector.load %arg12[%c0_42, %c0_43] : memref<144x128xf32, #tpu.memory_space<vmem>>, vector<144x128xf32>
    %cst_44 = arith.constant dense<0.000000e+00> : vector<16x128xf32>
    %52 = tpu.matmul %50, %51, %cst_44 {dimension_numbers = #tpu.dot_dimension_numbers<[1], [0], [0], [1], [0, 0, 1, 1], [], []>} : vector<16x144xf32>, vector<144x128xf32>, vector<16x128xf32> -> vector<16x128xf32>
    %c0_45 = arith.constant 0 : index
    %c0_46 = arith.constant 0 : index
    %53 = vector.load %arg6[%c0_45, %c0_46] : memref<16x1xf32, #tpu.memory_space<vmem>>, vector<16x1xf32>
    %54 = vector.broadcast %53 : vector<16x1xf32> to vector<16x128xf32>
    %55 = arith.addf %52, %54 : vector<16x128xf32>
    %cst_47 = arith.constant 0.000000e+00 : f32
    %56 = vector.broadcast %cst_47 : f32 to vector<16x128xf32>
    %57 = arith.maximumf %55, %56 : vector<16x128xf32>
    %58 = vector.extract_strided_slice %57 {offsets = [0, 0], sizes = [1, 64], strides = [1, 1]} : vector<16x128xf32> to vector<1x64xf32>
    %c0_48 = arith.constant 0 : index
    %c0_49 = arith.constant 0 : index
    %59 = vector.load %arg13[%c0_48, %c0_49] : memref<2x1024xf32, #tpu.memory_space<vmem>>, vector<1x64xf32>
    tpu.vector_store %arg13[%c0_48, %c0_49], %58 {strides = array<i32>} : memref<2x1024xf32, #tpu.memory_space<vmem>>, vector<1x64xf32>,
    %60 = vector.extract_strided_slice %57 {offsets = [1, 0], sizes = [1, 64], strides = [1, 1]} : vector<16x128xf32> to vector<1x64xf32>
    %c0_50 = arith.constant 0 : index
    %c64_51 = arith.constant 64 : index
    %61 = vector.load %arg13[%c0_50, %c64_51] : memref<2x1024xf32, #tpu.memory_space<vmem>>, vector<1x64xf32>
    tpu.vector_store %arg13[%c0_50, %c64_51], %60 {strides = array<i32>} : memref<2x1024xf32, #tpu.memory_space<vmem>>, vector<1x64xf32>,
    %62 = vector.extract_strided_slice %57 {offsets = [2, 0], sizes = [1, 64], strides = [1, 1]} : vector<16x128xf32> to vector<1x64xf32>
    %c0_52 = arith.constant 0 : index
    %c128_53 = arith.constant 128 : index
    %63 = vector.load %arg13[%c0_52, %c128_53] : memref<2x1024xf32, #tpu.memory_space<vmem>>, vector<1x64xf32>
    tpu.vector_store %arg13[%c0_52, %c128_53], %62 {strides = array<i32>} : memref<2x1024xf32, #tpu.memory_space<vmem>>, vector<1x64xf32>,
    %64 = vector.extract_strided_slice %57 {offsets = [3, 0], sizes = [1, 64], strides = [1, 1]} : vector<16x128xf32> to vector<1x64xf32>
    %c0_54 = arith.constant 0 : index
    %c192 = arith.constant 192 : index
    %65 = vector.load %arg13[%c0_54, %c192] : memref<2x1024xf32, #tpu.memory_space<vmem>>, vector<1x64xf32>
    tpu.vector_store %arg13[%c0_54, %c192], %64 {strides = array<i32>} : memref<2x1024xf32, #tpu.memory_space<vmem>>, vector<1x64xf32>,
    %66 = vector.extract_strided_slice %57 {offsets = [4, 0], sizes = [1, 64], strides = [1, 1]} : vector<16x128xf32> to vector<1x64xf32>
    %c0_55 = arith.constant 0 : index
    %c256 = arith.constant 256 : index
    %67 = vector.load %arg13[%c0_55, %c256] : memref<2x1024xf32, #tpu.memory_space<vmem>>, vector<1x64xf32>
    tpu.vector_store %arg13[%c0_55, %c256], %66 {strides = array<i32>} : memref<2x1024xf32, #tpu.memory_space<vmem>>, vector<1x64xf32>,
    %68 = vector.extract_strided_slice %57 {offsets = [5, 0], sizes = [1, 64], strides = [1, 1]} : vector<16x128xf32> to vector<1x64xf32>
    %c0_56 = arith.constant 0 : index
    %c320 = arith.constant 320 : index
    %69 = vector.load %arg13[%c0_56, %c320] : memref<2x1024xf32, #tpu.memory_space<vmem>>, vector<1x64xf32>
    tpu.vector_store %arg13[%c0_56, %c320], %68 {strides = array<i32>} : memref<2x1024xf32, #tpu.memory_space<vmem>>, vector<1x64xf32>,
    %70 = vector.extract_strided_slice %57 {offsets = [6, 0], sizes = [1, 64], strides = [1, 1]} : vector<16x128xf32> to vector<1x64xf32>
    %c0_57 = arith.constant 0 : index
    %c384 = arith.constant 384 : index
    %71 = vector.load %arg13[%c0_57, %c384] : memref<2x1024xf32, #tpu.memory_space<vmem>>, vector<1x64xf32>
    tpu.vector_store %arg13[%c0_57, %c384], %70 {strides = array<i32>} : memref<2x1024xf32, #tpu.memory_space<vmem>>, vector<1x64xf32>,
    %72 = vector.extract_strided_slice %57 {offsets = [7, 0], sizes = [1, 64], strides = [1, 1]} : vector<16x128xf32> to vector<1x64xf32>
    %c0_58 = arith.constant 0 : index
    %c448 = arith.constant 448 : index
    %73 = vector.load %arg13[%c0_58, %c448] : memref<2x1024xf32, #tpu.memory_space<vmem>>, vector<1x64xf32>
    tpu.vector_store %arg13[%c0_58, %c448], %72 {strides = array<i32>} : memref<2x1024xf32, #tpu.memory_space<vmem>>, vector<1x64xf32>,
    %74 = vector.extract_strided_slice %57 {offsets = [8, 0], sizes = [1, 64], strides = [1, 1]} : vector<16x128xf32> to vector<1x64xf32>
    %c0_59 = arith.constant 0 : index
    %c512 = arith.constant 512 : index
    %75 = vector.load %arg13[%c0_59, %c512] : memref<2x1024xf32, #tpu.memory_space<vmem>>, vector<1x64xf32>
    tpu.vector_store %arg13[%c0_59, %c512], %74 {strides = array<i32>} : memref<2x1024xf32, #tpu.memory_space<vmem>>, vector<1x64xf32>,
    %76 = vector.extract_strided_slice %57 {offsets = [9, 0], sizes = [1, 64], strides = [1, 1]} : vector<16x128xf32> to vector<1x64xf32>
    %c0_60 = arith.constant 0 : index
    %c576 = arith.constant 576 : index
    %77 = vector.load %arg13[%c0_60, %c576] : memref<2x1024xf32, #tpu.memory_space<vmem>>, vector<1x64xf32>
    tpu.vector_store %arg13[%c0_60, %c576], %76 {strides = array<i32>} : memref<2x1024xf32, #tpu.memory_space<vmem>>, vector<1x64xf32>,
    %78 = vector.extract_strided_slice %57 {offsets = [10, 0], sizes = [1, 64], strides = [1, 1]} : vector<16x128xf32> to vector<1x64xf32>
    %c0_61 = arith.constant 0 : index
    %c640 = arith.constant 640 : index
    %79 = vector.load %arg13[%c0_61, %c640] : memref<2x1024xf32, #tpu.memory_space<vmem>>, vector<1x64xf32>
    tpu.vector_store %arg13[%c0_61, %c640], %78 {strides = array<i32>} : memref<2x1024xf32, #tpu.memory_space<vmem>>, vector<1x64xf32>,
    %80 = vector.extract_strided_slice %57 {offsets = [11, 0], sizes = [1, 64], strides = [1, 1]} : vector<16x128xf32> to vector<1x64xf32>
    %c0_62 = arith.constant 0 : index
    %c704 = arith.constant 704 : index
    %81 = vector.load %arg13[%c0_62, %c704] : memref<2x1024xf32, #tpu.memory_space<vmem>>, vector<1x64xf32>
    tpu.vector_store %arg13[%c0_62, %c704], %80 {strides = array<i32>} : memref<2x1024xf32, #tpu.memory_space<vmem>>, vector<1x64xf32>,
    %82 = vector.extract_strided_slice %57 {offsets = [12, 0], sizes = [1, 64], strides = [1, 1]} : vector<16x128xf32> to vector<1x64xf32>
    %c0_63 = arith.constant 0 : index
    %c768 = arith.constant 768 : index
    %83 = vector.load %arg13[%c0_63, %c768] : memref<2x1024xf32, #tpu.memory_space<vmem>>, vector<1x64xf32>
    tpu.vector_store %arg13[%c0_63, %c768], %82 {strides = array<i32>} : memref<2x1024xf32, #tpu.memory_space<vmem>>, vector<1x64xf32>,
    %84 = vector.extract_strided_slice %57 {offsets = [13, 0], sizes = [1, 64], strides = [1, 1]} : vector<16x128xf32> to vector<1x64xf32>
    %c0_64 = arith.constant 0 : index
    %c832 = arith.constant 832 : index
    %85 = vector.load %arg13[%c0_64, %c832] : memref<2x1024xf32, #tpu.memory_space<vmem>>, vector<1x64xf32>
    tpu.vector_store %arg13[%c0_64, %c832], %84 {strides = array<i32>} : memref<2x1024xf32, #tpu.memory_space<vmem>>, vector<1x64xf32>,
    %86 = vector.extract_strided_slice %57 {offsets = [14, 0], sizes = [1, 64], strides = [1, 1]} : vector<16x128xf32> to vector<1x64xf32>
    %c0_65 = arith.constant 0 : index
    %c896 = arith.constant 896 : index
    %87 = vector.load %arg13[%c0_65, %c896] : memref<2x1024xf32, #tpu.memory_space<vmem>>, vector<1x64xf32>
    tpu.vector_store %arg13[%c0_65, %c896], %86 {strides = array<i32>} : memref<2x1024xf32, #tpu.memory_space<vmem>>, vector<1x64xf32>,
    %88 = vector.extract_strided_slice %57 {offsets = [15, 0], sizes = [1, 64], strides = [1, 1]} : vector<16x128xf32> to vector<1x64xf32>
    %c0_66 = arith.constant 0 : index
    %c960 = arith.constant 960 : index
    %89 = vector.load %arg13[%c0_66, %c960] : memref<2x1024xf32, #tpu.memory_space<vmem>>, vector<1x64xf32>
    tpu.vector_store %arg13[%c0_66, %c960], %88 {strides = array<i32>} : memref<2x1024xf32, #tpu.memory_space<vmem>>, vector<1x64xf32>,
    %90 = vector.extract_strided_slice %57 {offsets = [0, 64], sizes = [1, 64], strides = [1, 1]} : vector<16x128xf32> to vector<1x64xf32>
    %c1 = arith.constant 1 : index
    %c0_67 = arith.constant 0 : index
    %91 = vector.load %arg13[%c1, %c0_67] : memref<2x1024xf32, #tpu.memory_space<vmem>>, vector<1x64xf32>
    tpu.vector_store %arg13[%c1, %c0_67], %90 {strides = array<i32>} : memref<2x1024xf32, #tpu.memory_space<vmem>>, vector<1x64xf32>,
    %92 = vector.extract_strided_slice %57 {offsets = [1, 64], sizes = [1, 64], strides = [1, 1]} : vector<16x128xf32> to vector<1x64xf32>
    %c1_68 = arith.constant 1 : index
    %c64_69 = arith.constant 64 : index
    %93 = vector.load %arg13[%c1_68, %c64_69] : memref<2x1024xf32, #tpu.memory_space<vmem>>, vector<1x64xf32>
    tpu.vector_store %arg13[%c1_68, %c64_69], %92 {strides = array<i32>} : memref<2x1024xf32, #tpu.memory_space<vmem>>, vector<1x64xf32>,
    %94 = vector.extract_strided_slice %57 {offsets = [2, 64], sizes = [1, 64], strides = [1, 1]} : vector<16x128xf32> to vector<1x64xf32>
    %c1_70 = arith.constant 1 : index
    %c128_71 = arith.constant 128 : index
    %95 = vector.load %arg13[%c1_70, %c128_71] : memref<2x1024xf32, #tpu.memory_space<vmem>>, vector<1x64xf32>
    tpu.vector_store %arg13[%c1_70, %c128_71], %94 {strides = array<i32>} : memref<2x1024xf32, #tpu.memory_space<vmem>>, vector<1x64xf32>,
    %96 = vector.extract_strided_slice %57 {offsets = [3, 64], sizes = [1, 64], strides = [1, 1]} : vector<16x128xf32> to vector<1x64xf32>
    %c1_72 = arith.constant 1 : index
    %c192_73 = arith.constant 192 : index
    %97 = vector.load %arg13[%c1_72, %c192_73] : memref<2x1024xf32, #tpu.memory_space<vmem>>, vector<1x64xf32>
    tpu.vector_store %arg13[%c1_72, %c192_73], %96 {strides = array<i32>} : memref<2x1024xf32, #tpu.memory_space<vmem>>, vector<1x64xf32>,
    %98 = vector.extract_strided_slice %57 {offsets = [4, 64], sizes = [1, 64], strides = [1, 1]} : vector<16x128xf32> to vector<1x64xf32>
    %c1_74 = arith.constant 1 : index
    %c256_75 = arith.constant 256 : index
    %99 = vector.load %arg13[%c1_74, %c256_75] : memref<2x1024xf32, #tpu.memory_space<vmem>>, vector<1x64xf32>
    tpu.vector_store %arg13[%c1_74, %c256_75], %98 {strides = array<i32>} : memref<2x1024xf32, #tpu.memory_space<vmem>>, vector<1x64xf32>,
    %100 = vector.extract_strided_slice %57 {offsets = [5, 64], sizes = [1, 64], strides = [1, 1]} : vector<16x128xf32> to vector<1x64xf32>
    %c1_76 = arith.constant 1 : index
    %c320_77 = arith.constant 320 : index
    %101 = vector.load %arg13[%c1_76, %c320_77] : memref<2x1024xf32, #tpu.memory_space<vmem>>, vector<1x64xf32>
    tpu.vector_store %arg13[%c1_76, %c320_77], %100 {strides = array<i32>} : memref<2x1024xf32, #tpu.memory_space<vmem>>, vector<1x64xf32>,
    %102 = vector.extract_strided_slice %57 {offsets = [6, 64], sizes = [1, 64], strides = [1, 1]} : vector<16x128xf32> to vector<1x64xf32>
    %c1_78 = arith.constant 1 : index
    %c384_79 = arith.constant 384 : index
    %103 = vector.load %arg13[%c1_78, %c384_79] : memref<2x1024xf32, #tpu.memory_space<vmem>>, vector<1x64xf32>
    tpu.vector_store %arg13[%c1_78, %c384_79], %102 {strides = array<i32>} : memref<2x1024xf32, #tpu.memory_space<vmem>>, vector<1x64xf32>,
    %104 = vector.extract_strided_slice %57 {offsets = [7, 64], sizes = [1, 64], strides = [1, 1]} : vector<16x128xf32> to vector<1x64xf32>
    %c1_80 = arith.constant 1 : index
    %c448_81 = arith.constant 448 : index
    %105 = vector.load %arg13[%c1_80, %c448_81] : memref<2x1024xf32, #tpu.memory_space<vmem>>, vector<1x64xf32>
    tpu.vector_store %arg13[%c1_80, %c448_81], %104 {strides = array<i32>} : memref<2x1024xf32, #tpu.memory_space<vmem>>, vector<1x64xf32>,
    %106 = vector.extract_strided_slice %57 {offsets = [8, 64], sizes = [1, 64], strides = [1, 1]} : vector<16x128xf32> to vector<1x64xf32>
    %c1_82 = arith.constant 1 : index
    %c512_83 = arith.constant 512 : index
    %107 = vector.load %arg13[%c1_82, %c512_83] : memref<2x1024xf32, #tpu.memory_space<vmem>>, vector<1x64xf32>
    tpu.vector_store %arg13[%c1_82, %c512_83], %106 {strides = array<i32>} : memref<2x1024xf32, #tpu.memory_space<vmem>>, vector<1x64xf32>,
    %108 = vector.extract_strided_slice %57 {offsets = [9, 64], sizes = [1, 64], strides = [1, 1]} : vector<16x128xf32> to vector<1x64xf32>
    %c1_84 = arith.constant 1 : index
    %c576_85 = arith.constant 576 : index
    %109 = vector.load %arg13[%c1_84, %c576_85] : memref<2x1024xf32, #tpu.memory_space<vmem>>, vector<1x64xf32>
    tpu.vector_store %arg13[%c1_84, %c576_85], %108 {strides = array<i32>} : memref<2x1024xf32, #tpu.memory_space<vmem>>, vector<1x64xf32>,
    %110 = vector.extract_strided_slice %57 {offsets = [10, 64], sizes = [1, 64], strides = [1, 1]} : vector<16x128xf32> to vector<1x64xf32>
    %c1_86 = arith.constant 1 : index
    %c640_87 = arith.constant 640 : index
    %111 = vector.load %arg13[%c1_86, %c640_87] : memref<2x1024xf32, #tpu.memory_space<vmem>>, vector<1x64xf32>
    tpu.vector_store %arg13[%c1_86, %c640_87], %110 {strides = array<i32>} : memref<2x1024xf32, #tpu.memory_space<vmem>>, vector<1x64xf32>,
    %112 = vector.extract_strided_slice %57 {offsets = [11, 64], sizes = [1, 64], strides = [1, 1]} : vector<16x128xf32> to vector<1x64xf32>
    %c1_88 = arith.constant 1 : index
    %c704_89 = arith.constant 704 : index
    %113 = vector.load %arg13[%c1_88, %c704_89] : memref<2x1024xf32, #tpu.memory_space<vmem>>, vector<1x64xf32>
    tpu.vector_store %arg13[%c1_88, %c704_89], %112 {strides = array<i32>} : memref<2x1024xf32, #tpu.memory_space<vmem>>, vector<1x64xf32>,
    %114 = vector.extract_strided_slice %57 {offsets = [12, 64], sizes = [1, 64], strides = [1, 1]} : vector<16x128xf32> to vector<1x64xf32>
    %c1_90 = arith.constant 1 : index
    %c768_91 = arith.constant 768 : index
    %115 = vector.load %arg13[%c1_90, %c768_91] : memref<2x1024xf32, #tpu.memory_space<vmem>>, vector<1x64xf32>
    tpu.vector_store %arg13[%c1_90, %c768_91], %114 {strides = array<i32>} : memref<2x1024xf32, #tpu.memory_space<vmem>>, vector<1x64xf32>,
    %116 = vector.extract_strided_slice %57 {offsets = [13, 64], sizes = [1, 64], strides = [1, 1]} : vector<16x128xf32> to vector<1x64xf32>
    %c1_92 = arith.constant 1 : index
    %c832_93 = arith.constant 832 : index
    %117 = vector.load %arg13[%c1_92, %c832_93] : memref<2x1024xf32, #tpu.memory_space<vmem>>, vector<1x64xf32>
    tpu.vector_store %arg13[%c1_92, %c832_93], %116 {strides = array<i32>} : memref<2x1024xf32, #tpu.memory_space<vmem>>, vector<1x64xf32>,
    %118 = vector.extract_strided_slice %57 {offsets = [14, 64], sizes = [1, 64], strides = [1, 1]} : vector<16x128xf32> to vector<1x64xf32>
    %c1_94 = arith.constant 1 : index
    %c896_95 = arith.constant 896 : index
    %119 = vector.load %arg13[%c1_94, %c896_95] : memref<2x1024xf32, #tpu.memory_space<vmem>>, vector<1x64xf32>
    tpu.vector_store %arg13[%c1_94, %c896_95], %118 {strides = array<i32>} : memref<2x1024xf32, #tpu.memory_space<vmem>>, vector<1x64xf32>,
    %120 = vector.extract_strided_slice %57 {offsets = [15, 64], sizes = [1, 64], strides = [1, 1]} : vector<16x128xf32> to vector<1x64xf32>
    %c1_96 = arith.constant 1 : index
    %c960_97 = arith.constant 960 : index
    %121 = vector.load %arg13[%c1_96, %c960_97] : memref<2x1024xf32, #tpu.memory_space<vmem>>, vector<1x64xf32>
    tpu.vector_store %arg13[%c1_96, %c960_97], %120 {strides = array<i32>} : memref<2x1024xf32, #tpu.memory_space<vmem>>, vector<1x64xf32>,
    %c0_98 = arith.constant 0 : index
    %c0_99 = arith.constant 0 : index
    %122 = vector.load %arg13[%c0_98, %c0_99] : memref<2x1024xf32, #tpu.memory_space<vmem>>, vector<2x1024xf32>
    %c0_100 = arith.constant 0 : index
    %c0_101 = arith.constant 0 : index
    %123 = vector.load %arg7[%c0_100, %c0_101] : memref<1024x256xf32, #tpu.memory_space<vmem>>, vector<1024x256xf32>
    %cst_102 = arith.constant dense<0.000000e+00> : vector<2x256xf32>
    %124 = tpu.matmul %122, %123, %cst_102 {dimension_numbers = #tpu.dot_dimension_numbers<[1], [0], [0], [1], [0, 0, 1, 1], [], []>} : vector<2x1024xf32>, vector<1024x256xf32>, vector<2x256xf32> -> vector<2x256xf32>
    %c0_103 = arith.constant 0 : index
    %c0_104 = arith.constant 0 : index
    %125 = vector.load %arg8[%c0_103, %c0_104] : memref<1x256xf32, #tpu.memory_space<vmem>>, vector<1x256xf32>
    %126 = vector.broadcast %125 : vector<1x256xf32> to vector<2x256xf32>
    %127 = arith.addf %124, %126 : vector<2x256xf32>
    %cst_105 = arith.constant 0.000000e+00 : f32
    %128 = vector.broadcast %cst_105 : f32 to vector<2x256xf32>
    %129 = arith.maximumf %127, %128 : vector<2x256xf32>
    %c0_106 = arith.constant 0 : index
    %c0_107 = arith.constant 0 : index
    %130 = vector.load %arg9[%c0_106, %c0_107] : memref<256x6xf32, #tpu.memory_space<vmem>>, vector<256x6xf32>
    %cst_108 = arith.constant dense<0.000000e+00> : vector<2x6xf32>
    %131 = tpu.matmul %129, %130, %cst_108 {dimension_numbers = #tpu.dot_dimension_numbers<[1], [0], [0], [1], [0, 0, 1, 1], [], []>} : vector<2x256xf32>, vector<256x6xf32>, vector<2x6xf32> -> vector<2x6xf32>
    %c0_109 = arith.constant 0 : index
    %c0_110 = arith.constant 0 : index
    %132 = vector.load %arg10[%c0_109, %c0_110] : memref<1x6xf32, #tpu.memory_space<vmem>>, vector<1x6xf32>
    %133 = vector.broadcast %132 : vector<1x6xf32> to vector<2x6xf32>
    %134 = arith.addf %131, %133 : vector<2x6xf32>
    %c0_111 = arith.constant 0 : index
    %c0_112 = arith.constant 0 : index
    %135 = vector.load %arg11[%c0_111, %c0_112] : memref<2x6xf32, #tpu.memory_space<vmem>>, vector<2x6xf32>
    tpu.vector_store %arg11[%c0_111, %c0_112], %134 {strides = array<i32>} : memref<2x6xf32, #tpu.memory_space<vmem>>, vector<2x6xf32>,
    return
  }
  func.func @transform_0(%arg0: i32) -> (i32, i32) {
    %c0_i32 = arith.constant 0 : i32
    %c0_i32_0 = arith.constant 0 : i32
    return %c0_i32, %arg0 : i32, i32
  }
  func.func @transform_1(%arg0: i32) -> (i32, i32) {
    %c0_i32 = arith.constant 0 : i32
    %c0_i32_0 = arith.constant 0 : i32
    %c0_i32_1 = arith.constant 0 : i32
    return %c0_i32, %c0_i32_0 : i32, i32
  }
  func.func @transform_2(%arg0: i32) -> (i32, i32) {
    %c0_i32 = arith.constant 0 : i32
    %c0_i32_0 = arith.constant 0 : i32
    %c0_i32_1 = arith.constant 0 : i32
    return %c0_i32, %c0_i32_0 : i32, i32
  }
  func.func @transform_3(%arg0: i32) -> (i32, i32) {
    %c0_i32 = arith.constant 0 : i32
    %c0_i32_0 = arith.constant 0 : i32
    %c0_i32_1 = arith.constant 0 : i32
    return %c0_i32, %c0_i32_0 : i32, i32
  }
  func.func @transform_4(%arg0: i32) -> (i32, i32) {
    %c0_i32 = arith.constant 0 : i32
    %c0_i32_0 = arith.constant 0 : i32
    %c0_i32_1 = arith.constant 0 : i32
    return %c0_i32, %c0_i32_0 : i32, i32
  }
  func.func @transform_5(%arg0: i32) -> (i32, i32) {
    %c0_i32 = arith.constant 0 : i32
    %c0_i32_0 = arith.constant 0 : i32
    %c0_i32_1 = arith.constant 0 : i32
    return %c0_i32, %c0_i32_0 : i32, i32
  }
  func.func @transform_6(%arg0: i32) -> (i32, i32) {
    %c0_i32 = arith.constant 0 : i32
    %c0_i32_0 = arith.constant 0 : i32
    %c0_i32_1 = arith.constant 0 : i32
    return %c0_i32, %c0_i32_0 : i32, i32
  }
  func.func @transform_7(%arg0: i32) -> (i32, i32) {
    %c0_i32 = arith.constant 0 : i32
    %c0_i32_0 = arith.constant 0 : i32
    %c0_i32_1 = arith.constant 0 : i32
    return %c0_i32, %c0_i32_0 : i32, i32
  }
  func.func @transform_8(%arg0: i32) -> (i32, i32) {
    %c0_i32 = arith.constant 0 : i32
    %c0_i32_0 = arith.constant 0 : i32
    %c0_i32_1 = arith.constant 0 : i32
    return %c0_i32, %c0_i32_0 : i32, i32
  }
  func.func @transform_9(%arg0: i32) -> (i32, i32) {
    %c0_i32 = arith.constant 0 : i32
    %c0_i32_0 = arith.constant 0 : i32
    %c0_i32_1 = arith.constant 0 : i32
    return %c0_i32, %c0_i32_0 : i32, i32
  }
  func.func @transform_10(%arg0: i32) -> (i32, i32) {
    %c0_i32 = arith.constant 0 : i32
    %c0_i32_0 = arith.constant 0 : i32
    return %arg0, %c0_i32 : i32, i32
  }
}

</mosaic_0001>

<llo_original>
// kernel: cnn_forward.1
$region0: #{cnn_forward.1}
  #allocation0 [shape = 'u32[]', space=smem, size = 0x4, offset = 0x4, fixed_abs, tag = 'smem constant byte address 0x4 - core index']
  #allocation1 [shape = 'u32[72,128]{1,0:T(1,128)}', space=vmem, size = 0x9000, scoped, tag = 'internal scratch']
  #allocation2 [shape = 'f32[144,128]{1,0:T(8,128)}', space=vmem, size = 0x12000, scoped, tag = 'scratch operand']
  #allocation3 [shape = 'f32[2,1024]{1,0:T(2,128)}', space=vmem, size = 0x2000, scoped, tag = 'scratch operand']
  %s0 = inlined_call_operand.vmem [shape: f32[36,512], index: 0, kind: input, shape index: {}]
  %s1 = inlined_call_operand.vmem [shape: f32[256,576], index: 1, kind: input, shape index: {}]
  %s2 = inlined_call_operand.vmem [shape: f32[16,36], index: 2, kind: input, shape index: {}]
  %s3 = inlined_call_operand.vmem [shape: f32[16,1], index: 3, kind: input, shape index: {}]
  %s4 = inlined_call_operand.vmem [shape: f32[16,144], index: 4, kind: input, shape index: {}]
  %s5 = inlined_call_operand.vmem [shape: f32[16,1], index: 5, kind: input, shape index: {}]
  %s6 = inlined_call_operand.vmem [shape: f32[1024,256], index: 6, kind: input, shape index: {}]
  %s7 = inlined_call_operand.vmem [shape: f32[1,256], index: 7, kind: input, shape index: {}]
  %s8 = inlined_call_operand.vmem [shape: f32[256,6], index: 8, kind: input, shape index: {}]
  %s9 = inlined_call_operand.vmem [shape: f32[1,6], index: 9, kind: input, shape index: {}]
  %s10 = inlined_call_operand.hbm [shape: f32[2,6], index: 10, kind: output, shape index: {}]
  %s11 = sld [smem:[#allocation0]]
  $region50: #{cnn_forward.1} parent=0
    _
  %s13 = ssub.s32 1, %s11
  %s14 = scalar_select 0, %s13, %s11
  $region1: #{cnn_forward.1} parent=0
    #allocation4 [shape = 'u8[1024]{0}', space=vmem, size = 0x400, scoped, tag = 'output window, operand 0, single buffered']
    #allocation5 [shape = 's32[1]{0}', space=sflag, size = 0x4, scoped, tag = 'scoped memory for cnn_forward.1']
    %15 = vsyncpa [#allocation5], 0
    // Predicated region
    $region2: #{cnn_forward.1} parent=1 // pred_check
      _
    $region3: #{cnn_forward.1} parent=1 // pred_check_branch
      %17 = sbr.rel (0) target = $region5
    $region4: #{cnn_forward.1} parent=1 // pred_region
      _
    $region5: #{cnn_forward.1} parent=1 // pred_fallthru
      _
    // Predicated region
    $region6: #{cnn_forward.1} parent=1 // pred_check
      _
    $region7: #{cnn_forward.1} parent=1 // pred_check_branch
      %19 = sbr.rel (0) target = $region9
    $region8: #{cnn_forward.1} parent=1 // pred_region
      _
    $region9: #{cnn_forward.1} parent=1 // pred_fallthru
      _
    // Predicated region
    $region10: #{cnn_forward.1} parent=1 // pred_check
      _
    $region11: #{cnn_forward.1} parent=1 // pred_check_branch
      %21 = sbr.rel (0) target = $region13
    $region12: #{cnn_forward.1} parent=1 // pred_region
      _
    $region13: #{cnn_forward.1} parent=1 // pred_fallthru
      _
    // Predicated region
    $region14: #{cnn_forward.1} parent=1 // pred_check
      _
    $region15: #{cnn_forward.1} parent=1 // pred_check_branch
      %23 = sbr.rel (0) target = $region17
    $region16: #{cnn_forward.1} parent=1 // pred_region
      _
    $region17: #{cnn_forward.1} parent=1 // pred_fallthru
      _
    // Predicated region
    $region18: #{cnn_forward.1} parent=1 // pred_check
      _
    $region19: #{cnn_forward.1} parent=1 // pred_check_branch
      %25 = sbr.rel (0) target = $region21
    $region20: #{cnn_forward.1} parent=1 // pred_region
      _
    $region21: #{cnn_forward.1} parent=1 // pred_fallthru
      _
    // Predicated region
    $region22: #{cnn_forward.1} parent=1 // pred_check
      _
    $region23: #{cnn_forward.1} parent=1 // pred_check_branch
      %27 = sbr.rel (0) target = $region25
    $region24: #{cnn_forward.1} parent=1 // pred_region
      _
    $region25: #{cnn_forward.1} parent=1 // pred_fallthru
      _
    // Predicated region
    $region26: #{cnn_forward.1} parent=1 // pred_check
      _
    $region27: #{cnn_forward.1} parent=1 // pred_check_branch
      %29 = sbr.rel (0) target = $region29
    $region28: #{cnn_forward.1} parent=1 // pred_region
      _
    $region29: #{cnn_forward.1} parent=1 // pred_fallthru
      _
    // Predicated region
    $region30: #{cnn_forward.1} parent=1 // pred_check
      _
    $region31: #{cnn_forward.1} parent=1 // pred_check_branch
      %31 = sbr.rel (0) target = $region33
    $region32: #{cnn_forward.1} parent=1 // pred_region
      _
    $region33: #{cnn_forward.1} parent=1 // pred_fallthru
      _
    // Predicated region
    $region34: #{cnn_forward.1} parent=1 // pred_check
      _
    $region35: #{cnn_forward.1} parent=1 // pred_check_branch
      %33 = sbr.rel (0) target = $region37
    $region36: #{cnn_forward.1} parent=1 // pred_region
      _
    $region37: #{cnn_forward.1} parent=1 // pred_fallthru
      _
    // Predicated region
    $region38: #{cnn_forward.1} parent=1 // pred_check
      _
    $region39: #{cnn_forward.1} parent=1 // pred_check_branch
      %35 = sbr.rel (0) target = $region41
    $region40: #{cnn_forward.1} parent=1 // pred_region
      _
    $region41: #{cnn_forward.1} parent=1 // pred_fallthru
      _
    %v36 = vld [vmem:[%s2] sm:$0xff]
    %v37 = vld [vmem:[%s2 + $0x8] sm:$0xff]
    %v38 = vld [vmem:[%s0] sm:$0xff]
    %v39 = vld [vmem:[%s0 + $0x8] sm:$0xff]
    %v40 = vld [vmem:[%s0 + $0x10] sm:$0xff]
    %v41 = vld [vmem:[%s0 + $0x18] sm:$0xff]
    %v42 = vld [vmem:[%s0 + $0x20] sm:$0xff]
    %v43 = vld [vmem:[%s0 + $0x28] sm:$0xff]
    %v44 = vld [vmem:[%s0 + $0x30] sm:$0xff]
    %v45 = vld [vmem:[%s0 + $0x38] sm:$0xff]
    %v46 = vld [vmem:[%s0 + $0x40] sm:$0xff]
    %v47 = vld [vmem:[%s0 + $0x48] sm:$0xff]
    %v48 = vld [vmem:[%s0 + $0x50] sm:$0xff]
    %v49 = vld [vmem:[%s0 + $0x58] sm:$0xff]
    %v50 = vld [vmem:[%s0 + $0x60] sm:$0xff]
    %v51 = vld [vmem:[%s0 + $0x68] sm:$0xff]
    %v52 = vld [vmem:[%s0 + $0x70] sm:$0xff]
    %v53 = vld [vmem:[%s0 + $0x78] sm:$0xff]
    %v54 = vld [vmem:[%s0 + $0x80] sm:$0xf]
    %v55 = vld [vmem:[%s0 + $0x88] sm:$0xf]
    %v56 = vld [vmem:[%s0 + $0x90] sm:$0xf]
    %v57 = vld [vmem:[%s0 + $0x98] sm:$0xf]
    %v58 = vld [vmem:[%s3] sm:$0xff]
    %v59 = vld [vmem:[%s3 + $0x8] sm:$0xff]
    %61 = vset.pattern.permute.xlu0 0
    %62 = vperm.xlu0 %61, %v58
    %v63 = vpop.permute.xlu0 %62
    %66 = vset.pattern.permute.xlu0 0
    %67 = vperm.xlu0 %66, %v59
    %v68 = vpop.permute.xlu0 %67
    %vm70 = vcmask 293888
    %v72 = vsel %vm70, %v36, 0
    %v75 = vsel %vm70, %v37, 0
    %vm77 = vcmask 1043456
    %v79 = vsel %vm77, %v54, 0
    %v82 = vsel %vm77, %v55, 0
    %v85 = vsel %vm77, %v56, 0
    %v88 = vsel %vm77, %v57, 0
    %90 = vmatpush.msra.mxu0 0.0
    %91 = vmatpush.msra.mxu0 0.0
    %92 = vmatpush.msra.mxu0 0.0
    %93 = vmatpush.msra.mxu0 0.0
    %94 = vmatpush.msra.mxu0 0.0
    %95 = vmatpush.msra.mxu0 0.0
    %96 = vmatpush.msra.mxu0 0.0
    %97 = vmatpush.msra.mxu0 0.0
    %98 = vmatpush.msra.mxu0 0.0
    %99 = vmatpush.msra.mxu0 0.0
    %100 = vmatpush.msra.mxu0 0.0
    %101 = vmatpush.msra.mxu0 %v79
    %102 = vmatpush.msra.mxu0 %v50
    %103 = vmatpush.msra.mxu0 %v46
    %104 = vmatpush.msra.mxu0 %v42
    %105 = vmatpush.msra.mxu0 %v38
    %106 = vmatmul.f32.gmra.mxu0 %v72
    %v107 = vpop.f32.mrf.mxu0
    %v108 = vadd.f32 %v63, %v107
    %109 = vmatmul.f32.gmra.mxu0 %v75
    %v110 = vpop.f32.mrf.mxu0
    %v111 = vadd.f32 %v68, %v110
    %112 = vdwg.mxu0
    %113 = vmatpush.msra.mxu0 0.0
    %114 = vmatpush.msra.mxu0 0.0
    %115 = vmatpush.msra.mxu0 0.0
    %116 = vmatpush.msra.mxu0 0.0
    %117 = vmatpush.msra.mxu0 0.0
    %118 = vmatpush.msra.mxu0 0.0
    %119 = vmatpush.msra.mxu0 0.0
    %120 = vmatpush.msra.mxu0 0.0
    %121 = vmatpush.msra.mxu0 0.0
    %122 = vmatpush.msra.mxu0 0.0
    %123 = vmatpush.msra.mxu0 0.0
    %124 = vmatpush.msra.mxu0 %v82
    %125 = vmatpush.msra.mxu0 %v51
    %126 = vmatpush.msra.mxu0 %v47
    %127 = vmatpush.msra.mxu0 %v43
    %128 = vmatpush.msra.mxu0 %v39
    %129 = vmatmul.f32.gmra.mxu0 %v72
    %v130 = vpop.f32.mrf.mxu0
    %v131 = vadd.f32 %v63, %v130
    %132 = vmatmul.f32.gmra.mxu0 %v75
    %v133 = vpop.f32.mrf.mxu0
    %v134 = vadd.f32 %v68, %v133
    %135 = vdwg.mxu0
    %136 = vmatpush.msra.mxu0 0.0
    %137 = vmatpush.msra.mxu0 0.0
    %138 = vmatpush.msra.mxu0 0.0
    %139 = vmatpush.msra.mxu0 0.0
    %140 = vmatpush.msra.mxu0 0.0
    %141 = vmatpush.msra.mxu0 0.0
    %142 = vmatpush.msra.mxu0 0.0
    %143 = vmatpush.msra.mxu0 0.0
    %144 = vmatpush.msra.mxu0 0.0
    %145 = vmatpush.msra.mxu0 0.0
    %146 = vmatpush.msra.mxu0 0.0
    %147 = vmatpush.msra.mxu0 %v85
    %148 = vmatpush.msra.mxu0 %v52
    %149 = vmatpush.msra.mxu0 %v48
    %150 = vmatpush.msra.mxu0 %v44
    %151 = vmatpush.msra.mxu0 %v40
    %152 = vmatmul.f32.gmra.mxu0 %v72
    %v153 = vpop.f32.mrf.mxu0
    %v154 = vadd.f32 %v63, %v153
    %155 = vmatmul.f32.gmra.mxu0 %v75
    %v156 = vpop.f32.mrf.mxu0
    %v157 = vadd.f32 %v68, %v156
    %158 = vdwg.mxu0
    %159 = vmatpush.msra.mxu0 0.0
    %160 = vmatpush.msra.mxu0 0.0
    %161 = vmatpush.msra.mxu0 0.0
    %162 = vmatpush.msra.mxu0 0.0
    %163 = vmatpush.msra.mxu0 0.0
    %164 = vmatpush.msra.mxu0 0.0
    %165 = vmatpush.msra.mxu0 0.0
    %166 = vmatpush.msra.mxu0 0.0
    %167 = vmatpush.msra.mxu0 0.0
    %168 = vmatpush.msra.mxu0 0.0
    %169 = vmatpush.msra.mxu0 0.0
    %170 = vmatpush.msra.mxu0 %v88
    %171 = vmatpush.msra.mxu0 %v53
    %172 = vmatpush.msra.mxu0 %v49
    %173 = vmatpush.msra.mxu0 %v45
    %174 = vmatpush.msra.mxu0 %v41
    %175 = vmatmul.f32.gmra.mxu0 %v72
    %v176 = vpop.f32.mrf.mxu0
    %v177 = vadd.f32 %v63, %v176
    %178 = vmatmul.f32.gmra.mxu0 %v75
    %v179 = vpop.f32.mrf.mxu0
    %v180 = vadd.f32 %v68, %v179
    %181 = vdwg.mxu0
    %v182 = vmax.f32 %v108, 0.0
    %v183 = vmax.f32 %v131, 0.0
    %v184 = vmax.f32 %v154, 0.0
    %v185 = vmax.f32 %v177, 0.0
    %v186 = vmax.f32 %v111, 0.0
    %v187 = vmax.f32 %v134, 0.0
    %v188 = vmax.f32 %v157, 0.0
    %v189 = vmax.f32 %v180, 0.0
    %v190 = vld [vmem:[%s1] sm:$0xff]
    %v191 = vld [vmem:[%s1 + $0x8] sm:$0xff]
    %v192 = vld [vmem:[%s1 + $0x10] sm:$0xff]
    %v193 = vld [vmem:[%s1 + $0x18] sm:$0xff]
    %v194 = vld [vmem:[%s1 + $0x20] sm:$0xff]
    %v195 = vld [vmem:[%s1 + $0x28] sm:$0xff]
    %v196 = vld [vmem:[%s1 + $0x30] sm:$0xff]
    %v197 = vld [vmem:[%s1 + $0x38] sm:$0xff]
    %v198 = vld [vmem:[%s1 + $0x40] sm:$0xff]
    %v199 = vld [vmem:[%s1 + $0x48] sm:$0xff]
    %v200 = vld [vmem:[%s1 + $0x50] sm:$0xff]
    %v201 = vld [vmem:[%s1 + $0x58] sm:$0xff]
    %v202 = vld [vmem:[%s1 + $0x60] sm:$0xff]
    %v203 = vld [vmem:[%s1 + $0x68] sm:$0xff]
    %v204 = vld [vmem:[%s1 + $0x70] sm:$0xff]
    %v205 = vld [vmem:[%s1 + $0x78] sm:$0xff]
    %v206 = vld [vmem:[%s1 + $0x80] sm:$0xff]
    %v207 = vld [vmem:[%s1 + $0x88] sm:$0xff]
    %v208 = vld [vmem:[%s1 + $0x90] sm:$0xff]
    %v209 = vld [vmem:[%s1 + $0x98] sm:$0xff]
    %v210 = vld [vmem:[%s1 + $0xa0] sm:$0xff]
    %v211 = vld [vmem:[%s1 + $0xa8] sm:$0xff]
    %v212 = vld [vmem:[%s1 + $0xb0] sm:$0xff]
    %v213 = vld [vmem:[%s1 + $0xb8] sm:$0xff]
    %v214 = vld [vmem:[%s1 + $0xc0] sm:$0xff]
    %v215 = vld [vmem:[%s1 + $0xc8] sm:$0xff]
    %v216 = vld [vmem:[%s1 + $0xd0] sm:$0xff]
    %v217 = vld [vmem:[%s1 + $0xd8] sm:$0xff]
    %v218 = vld [vmem:[%s1 + $0xe0] sm:$0xff]
    %v219 = vld [vmem:[%s1 + $0xe8] sm:$0xff]
    %v220 = vld [vmem:[%s1 + $0xf0] sm:$0xff]
    %v221 = vld [vmem:[%s1 + $0xf8] sm:$0xff]
    %v222 = vld [vmem:[%s1 + $0x100] sm:$0xff]
    %v223 = vld [vmem:[%s1 + $0x108] sm:$0xff]
    %v224 = vld [vmem:[%s1 + $0x110] sm:$0xff]
    %v225 = vld [vmem:[%s1 + $0x118] sm:$0xff]
    %v226 = vld [vmem:[%s1 + $0x120] sm:$0xff]
    %v227 = vld [vmem:[%s1 + $0x128] sm:$0xff]
    %v228 = vld [vmem:[%s1 + $0x130] sm:$0xff]
    %v229 = vld [vmem:[%s1 + $0x138] sm:$0xff]
    %v230 = vld [vmem:[%s1 + $0x140] sm:$0xff]
    %v231 = vld [vmem:[%s1 + $0x148] sm:$0xff]
    %v232 = vld [vmem:[%s1 + $0x150] sm:$0xff]
    %v233 = vld [vmem:[%s1 + $0x158] sm:$0xff]
    %v234 = vld [vmem:[%s1 + $0x160] sm:$0xff]
    %v235 = vld [vmem:[%s1 + $0x168] sm:$0xff]
    %v236 = vld [vmem:[%s1 + $0x170] sm:$0xff]
    %v237 = vld [vmem:[%s1 + $0x178] sm:$0xff]
    %v238 = vld [vmem:[%s1 + $0x180] sm:$0xff]
    %v239 = vld [vmem:[%s1 + $0x188] sm:$0xff]
    %v240 = vld [vmem:[%s1 + $0x190] sm:$0xff]
    %v241 = vld [vmem:[%s1 + $0x198] sm:$0xff]
    %v242 = vld [vmem:[%s1 + $0x1a0] sm:$0xff]
    %v243 = vld [vmem:[%s1 + $0x1a8] sm:$0xff]
    %v244 = vld [vmem:[%s1 + $0x1b0] sm:$0xff]
    %v245 = vld [vmem:[%s1 + $0x1b8] sm:$0xff]
    %v246 = vld [vmem:[%s1 + $0x1c0] sm:$0xff]
    %v247 = vld [vmem:[%s1 + $0x1c8] sm:$0xff]
    %v248 = vld [vmem:[%s1 + $0x1d0] sm:$0xff]
    %v249 = vld [vmem:[%s1 + $0x1d8] sm:$0xff]
    %v250 = vld [vmem:[%s1 + $0x1e0] sm:$0xff]
    %v251 = vld [vmem:[%s1 + $0x1e8] sm:$0xff]
    %v252 = vld [vmem:[%s1 + $0x1f0] sm:$0xff]
    %v253 = vld [vmem:[%s1 + $0x1f8] sm:$0xff]
    %v254 = vld [vmem:[%s1 + $0x200] sm:$0xff]
    %v255 = vld [vmem:[%s1 + $0x208] sm:$0xff]
    %v256 = vld [vmem:[%s1 + $0x210] sm:$0xff]
    %v257 = vld [vmem:[%s1 + $0x218] sm:$0xff]
    %v258 = vld [vmem:[%s1 + $0x220] sm:$0xff]
    %v259 = vld [vmem:[%s1 + $0x228] sm:$0xff]
    %v260 = vld [vmem:[%s1 + $0x230] sm:$0xff]
    %v261 = vld [vmem:[%s1 + $0x238] sm:$0xff]
    %v262 = vld [vmem:[%s1 + $0x240] sm:$0xff]
    %v263 = vld [vmem:[%s1 + $0x248] sm:$0xff]
    %v264 = vld [vmem:[%s1 + $0x250] sm:$0xff]
    %v265 = vld [vmem:[%s1 + $0x258] sm:$0xff]
    %v266 = vld [vmem:[%s1 + $0x260] sm:$0xff]
    %v267 = vld [vmem:[%s1 + $0x268] sm:$0xff]
    %v268 = vld [vmem:[%s1 + $0x270] sm:$0xff]
    %v269 = vld [vmem:[%s1 + $0x278] sm:$0xff]
    %v270 = vld [vmem:[%s1 + $0x280] sm:$0xff]
    %v271 = vld [vmem:[%s1 + $0x288] sm:$0xff]
    %v272 = vld [vmem:[%s1 + $0x290] sm:$0xff]
    %v273 = vld [vmem:[%s1 + $0x298] sm:$0xff]
    %v274 = vld [vmem:[%s1 + $0x2a0] sm:$0xff]
    %v275 = vld [vmem:[%s1 + $0x2a8] sm:$0xff]
    %v276 = vld [vmem:[%s1 + $0x2b0] sm:$0xff]
    %v277 = vld [vmem:[%s1 + $0x2b8] sm:$0xff]
    %v278 = vld [vmem:[%s1 + $0x2c0] sm:$0xff]
    %v279 = vld [vmem:[%s1 + $0x2c8] sm:$0xff]
    %v280 = vld [vmem:[%s1 + $0x2d0] sm:$0xff]
    %v281 = vld [vmem:[%s1 + $0x2d8] sm:$0xff]
    %v282 = vld [vmem:[%s1 + $0x2e0] sm:$0xff]
    %v283 = vld [vmem:[%s1 + $0x2e8] sm:$0xff]
    %v284 = vld [vmem:[%s1 + $0x2f0] sm:$0xff]
    %v285 = vld [vmem:[%s1 + $0x2f8] sm:$0xff]
    %v286 = vld [vmem:[%s1 + $0x300] sm:$0xff]
    %v287 = vld [vmem:[%s1 + $0x308] sm:$0xff]
    %v288 = vld [vmem:[%s1 + $0x310] sm:$0xff]
    %v289 = vld [vmem:[%s1 + $0x318] sm:$0xff]
    %v290 = vld [vmem:[%s1 + $0x320] sm:$0xff]
    %v291 = vld [vmem:[%s1 + $0x328] sm:$0xff]
    %v292 = vld [vmem:[%s1 + $0x330] sm:$0xff]
    %v293 = vld [vmem:[%s1 + $0x338] sm:$0xff]
    %v294 = vld [vmem:[%s1 + $0x340] sm:$0xff]
    %v295 = vld [vmem:[%s1 + $0x348] sm:$0xff]
    %v296 = vld [vmem:[%s1 + $0x350] sm:$0xff]
    %v297 = vld [vmem:[%s1 + $0x358] sm:$0xff]
    %v298 = vld [vmem:[%s1 + $0x360] sm:$0xff]
    %v299 = vld [vmem:[%s1 + $0x368] sm:$0xff]
    %v300 = vld [vmem:[%s1 + $0x370] sm:$0xff]
    %v301 = vld [vmem:[%s1 + $0x378] sm:$0xff]
    %v302 = vld [vmem:[%s1 + $0x380] sm:$0xff]
    %v303 = vld [vmem:[%s1 + $0x388] sm:$0xff]
    %v304 = vld [vmem:[%s1 + $0x390] sm:$0xff]
    %v305 = vld [vmem:[%s1 + $0x398] sm:$0xff]
    %v306 = vld [vmem:[%s1 + $0x3a0] sm:$0xff]
    %v307 = vld [vmem:[%s1 + $0x3a8] sm:$0xff]
    %v308 = vld [vmem:[%s1 + $0x3b0] sm:$0xff]
    %v309 = vld [vmem:[%s1 + $0x3b8] sm:$0xff]
    %v310 = vld [vmem:[%s1 + $0x3c0] sm:$0xff]
    %v311 = vld [vmem:[%s1 + $0x3c8] sm:$0xff]
    %v312 = vld [vmem:[%s1 + $0x3d0] sm:$0xff]
    %v313 = vld [vmem:[%s1 + $0x3d8] sm:$0xff]
    %v314 = vld [vmem:[%s1 + $0x3e0] sm:$0xff]
    %v315 = vld [vmem:[%s1 + $0x3e8] sm:$0xff]
    %v316 = vld [vmem:[%s1 + $0x3f0] sm:$0xff]
    %v317 = vld [vmem:[%s1 + $0x3f8] sm:$0xff]
    %v318 = vld [vmem:[%s1 + $0x400] sm:$0xff]
    %v319 = vld [vmem:[%s1 + $0x408] sm:$0xff]
    %v320 = vld [vmem:[%s1 + $0x410] sm:$0xff]
    %v321 = vld [vmem:[%s1 + $0x418] sm:$0xff]
    %v322 = vld [vmem:[%s1 + $0x420] sm:$0xff]
    %v323 = vld [vmem:[%s1 + $0x428] sm:$0xff]
    %v324 = vld [vmem:[%s1 + $0x430] sm:$0xff]
    %v325 = vld [vmem:[%s1 + $0x438] sm:$0xff]
    %v326 = vld [vmem:[%s1 + $0x440] sm:$0xff]
    %v327 = vld [vmem:[%s1 + $0x448] sm:$0xff]
    %v328 = vld [vmem:[%s1 + $0x450] sm:$0xff]
    %v329 = vld [vmem:[%s1 + $0x458] sm:$0xff]
    %v330 = vld [vmem:[%s1 + $0x460] sm:$0xff]
    %v331 = vld [vmem:[%s1 + $0x468] sm:$0xff]
    %v332 = vld [vmem:[%s1 + $0x470] sm:$0xff]
    %v333 = vld [vmem:[%s1 + $0x478] sm:$0xff]
    %v334 = vld [vmem:[%s1 + $0x480] sm:$0xff]
    %v335 = vld [vmem:[%s1 + $0x488] sm:$0xff]
    %v336 = vld [vmem:[%s1 + $0x490] sm:$0xff]
    %v337 = vld [vmem:[%s1 + $0x498] sm:$0xff]
    %v338 = vld [vmem:[%s1 + $0x4a0] sm:$0xff]
    %v339 = vld [vmem:[%s1 + $0x4a8] sm:$0xff]
    %v340 = vld [vmem:[%s1 + $0x4b0] sm:$0xff]
    %v341 = vld [vmem:[%s1 + $0x4b8] sm:$0xff]
    %v342 = vld [vmem:[%s1 + $0x4c0] sm:$0xff]
    %v343 = vld [vmem:[%s1 + $0x4c8] sm:$0xff]
    %v344 = vld [vmem:[%s1 + $0x4d0] sm:$0xff]
    %v345 = vld [vmem:[%s1 + $0x4d8] sm:$0xff]
    %v346 = vld [vmem:[%s1 + $0x4e0] sm:$0xff]
    %v347 = vld [vmem:[%s1 + $0x4e8] sm:$0xff]
    %v348 = vld [vmem:[%s1 + $0x4f0] sm:$0xff]
    %v349 = vld [vmem:[%s1 + $0x4f8] sm:$0xff]
    %350 = vmatpush.msra.mxu0 %v265
    %351 = vmatpush.msra.mxu0 %v260
    %352 = vmatpush.msra.mxu0 %v255
    %353 = vmatpush.msra.mxu0 %v250
    %354 = vmatpush.msra.mxu0 %v245
    %355 = vmatpush.msra.mxu0 %v240
    %356 = vmatpush.msra.mxu0 %v235
    %357 = vmatpush.msra.mxu0 %v230
    %358 = vmatpush.msra.mxu0 %v225
    %359 = vmatpush.msra.mxu0 %v220
    %360 = vmatpush.msra.mxu0 %v215
    %361 = vmatpush.msra.mxu0 %v210
    %362 = vmatpush.msra.mxu0 %v205
    %363 = vmatpush.msra.mxu0 %v200
    %364 = vmatpush.msra.mxu0 %v195
    %365 = vmatpush.msra.mxu0 %v190
    %366 = vmatmul.f32.gmra.mxu0 %v182
    %v367 = vpop.f32.mrf.mxu0
    %v368 = vadd.f32 0.0, %v367
    %369 = vmatmul.f32.gmra.mxu0 %v186
    %v370 = vpop.f32.mrf.mxu0
    %v371 = vadd.f32 0.0, %v370
    %372 = vdwg.mxu0
    %373 = vmatpush.msra.mxu0 %v345
    %374 = vmatpush.msra.mxu0 %v340
    %375 = vmatpush.msra.mxu0 %v335
    %376 = vmatpush.msra.mxu0 %v330
    %377 = vmatpush.msra.mxu0 %v325
    %378 = vmatpush.msra.mxu0 %v320
    %379 = vmatpush.msra.mxu0 %v315
    %380 = vmatpush.msra.mxu0 %v310
    %381 = vmatpush.msra.mxu0 %v305
    %382 = vmatpush.msra.mxu0 %v300
    %383 = vmatpush.msra.mxu0 %v295
    %384 = vmatpush.msra.mxu0 %v290
    %385 = vmatpush.msra.mxu0 %v285
    %386 = vmatpush.msra.mxu0 %v280
    %387 = vmatpush.msra.mxu0 %v275
    %388 = vmatpush.msra.mxu0 %v270
    %389 = vmatmul.f32.gmra.mxu0 %v183
    %v390 = vpop.f32.mrf.mxu0
    %v391 = vadd.f32 %v368, %v390
    %392 = vmatmul.f32.gmra.mxu0 %v187
    %v393 = vpop.f32.mrf.mxu0
    %v394 = vadd.f32 %v371, %v393
    %395 = vdwg.mxu0
    %396 = vmatpush.msra.mxu0 %v266
    %397 = vmatpush.msra.mxu0 %v261
    %398 = vmatpush.msra.mxu0 %v256
    %399 = vmatpush.msra.mxu0 %v251
    %400 = vmatpush.msra.mxu0 %v246
    %401 = vmatpush.msra.mxu0 %v241
    %402 = vmatpush.msra.mxu0 %v236
    %403 = vmatpush.msra.mxu0 %v231
    %404 = vmatpush.msra.mxu0 %v226
    %405 = vmatpush.msra.mxu0 %v221
    %406 = vmatpush.msra.mxu0 %v216
    %407 = vmatpush.msra.mxu0 %v211
    %408 = vmatpush.msra.mxu0 %v206
    %409 = vmatpush.msra.mxu0 %v201
    %410 = vmatpush.msra.mxu0 %v196
    %411 = vmatpush.msra.mxu0 %v191
    %412 = vmatmul.f32.gmra.mxu0 %v182
    %v413 = vpop.f32.mrf.mxu0
    %v414 = vadd.f32 0.0, %v413
    %415 = vmatmul.f32.gmra.mxu0 %v186
    %v416 = vpop.f32.mrf.mxu0
    %v417 = vadd.f32 0.0, %v416
    %418 = vdwg.mxu0
    %419 = vmatpush.msra.mxu0 %v346
    %420 = vmatpush.msra.mxu0 %v341
    %421 = vmatpush.msra.mxu0 %v336
    %422 = vmatpush.msra.mxu0 %v331
    %423 = vmatpush.msra.mxu0 %v326
    %424 = vmatpush.msra.mxu0 %v321
    %425 = vmatpush.msra.mxu0 %v316
    %426 = vmatpush.msra.mxu0 %v311
    %427 = vmatpush.msra.mxu0 %v306
    %428 = vmatpush.msra.mxu0 %v301
    %429 = vmatpush.msra.mxu0 %v296
    %430 = vmatpush.msra.mxu0 %v291
    %431 = vmatpush.msra.mxu0 %v286
    %432 = vmatpush.msra.mxu0 %v281
    %433 = vmatpush.msra.mxu0 %v276
    %434 = vmatpush.msra.mxu0 %v271
    %435 = vmatmul.f32.gmra.mxu0 %v183
    %v436 = vpop.f32.mrf.mxu0
    %v437 = vadd.f32 %v414, %v436
    %438 = vmatmul.f32.gmra.mxu0 %v187
    %v439 = vpop.f32.mrf.mxu0
    %v440 = vadd.f32 %v417, %v439
    %441 = vdwg.mxu0
    %442 = vmatpush.msra.mxu0 %v267
    %443 = vmatpush.msra.mxu0 %v262
    %444 = vmatpush.msra.mxu0 %v257
    %445 = vmatpush.msra.mxu0 %v252
    %446 = vmatpush.msra.mxu0 %v247
    %447 = vmatpush.msra.mxu0 %v242
    %448 = vmatpush.msra.mxu0 %v237
    %449 = vmatpush.msra.mxu0 %v232
    %450 = vmatpush.msra.mxu0 %v227
    %451 = vmatpush.msra.mxu0 %v222
    %452 = vmatpush.msra.mxu0 %v217
    %453 = vmatpush.msra.mxu0 %v212
    %454 = vmatpush.msra.mxu0 %v207
    %455 = vmatpush.msra.mxu0 %v202
    %456 = vmatpush.msra.mxu0 %v197
    %457 = vmatpush.msra.mxu0 %v192
    %458 = vmatmul.f32.gmra.mxu0 %v182
    %v459 = vpop.f32.mrf.mxu0
    %v460 = vadd.f32 0.0, %v459
    %461 = vmatmul.f32.gmra.mxu0 %v186
    %v462 = vpop.f32.mrf.mxu0
    %v463 = vadd.f32 0.0, %v462
    %464 = vdwg.mxu0
    %465 = vmatpush.msra.mxu0 %v347
    %466 = vmatpush.msra.mxu0 %v342
    %467 = vmatpush.msra.mxu0 %v337
    %468 = vmatpush.msra.mxu0 %v332
    %469 = vmatpush.msra.mxu0 %v327
    %470 = vmatpush.msra.mxu0 %v322
    %471 = vmatpush.msra.mxu0 %v317
    %472 = vmatpush.msra.mxu0 %v312
    %473 = vmatpush.msra.mxu0 %v307
    %474 = vmatpush.msra.mxu0 %v302
    %475 = vmatpush.msra.mxu0 %v297
    %476 = vmatpush.msra.mxu0 %v292
    %477 = vmatpush.msra.mxu0 %v287
    %478 = vmatpush.msra.mxu0 %v282
    %479 = vmatpush.msra.mxu0 %v277
    %480 = vmatpush.msra.mxu0 %v272
    %481 = vmatmul.f32.gmra.mxu0 %v183
    %v482 = vpop.f32.mrf.mxu0
    %v483 = vadd.f32 %v460, %v482
    %484 = vmatmul.f32.gmra.mxu0 %v187
    %v485 = vpop.f32.mrf.mxu0
    %v486 = vadd.f32 %v463, %v485
    %487 = vdwg.mxu0
    %488 = vmatpush.msra.mxu0 %v268
    %489 = vmatpush.msra.mxu0 %v263
    %490 = vmatpush.msra.mxu0 %v258
    %491 = vmatpush.msra.mxu0 %v253
    %492 = vmatpush.msra.mxu0 %v248
    %493 = vmatpush.msra.mxu0 %v243
    %494 = vmatpush.msra.mxu0 %v238
    %495 = vmatpush.msra.mxu0 %v233
    %496 = vmatpush.msra.mxu0 %v228
    %497 = vmatpush.msra.mxu0 %v223
    %498 = vmatpush.msra.mxu0 %v218
    %499 = vmatpush.msra.mxu0 %v213
    %500 = vmatpush.msra.mxu0 %v208
    %501 = vmatpush.msra.mxu0 %v203
    %502 = vmatpush.msra.mxu0 %v198
    %503 = vmatpush.msra.mxu0 %v193
    %504 = vmatmul.f32.gmra.mxu0 %v182
    %v505 = vpop.f32.mrf.mxu0
    %v506 = vadd.f32 0.0, %v505
    %507 = vmatmul.f32.gmra.mxu0 %v186
    %v508 = vpop.f32.mrf.mxu0
    %v509 = vadd.f32 0.0, %v508
    %510 = vdwg.mxu0
    %511 = vmatpush.msra.mxu0 %v348
    %512 = vmatpush.msra.mxu0 %v343
    %513 = vmatpush.msra.mxu0 %v338
    %514 = vmatpush.msra.mxu0 %v333
    %515 = vmatpush.msra.mxu0 %v328
    %516 = vmatpush.msra.mxu0 %v323
    %517 = vmatpush.msra.mxu0 %v318
    %518 = vmatpush.msra.mxu0 %v313
    %519 = vmatpush.msra.mxu0 %v308
    %520 = vmatpush.msra.mxu0 %v303
    %521 = vmatpush.msra.mxu0 %v298
    %522 = vmatpush.msra.mxu0 %v293
    %523 = vmatpush.msra.mxu0 %v288
    %524 = vmatpush.msra.mxu0 %v283
    %525 = vmatpush.msra.mxu0 %v278
    %526 = vmatpush.msra.mxu0 %v273
    %527 = vmatmul.f32.gmra.mxu0 %v183
    %v528 = vpop.f32.mrf.mxu0
    %v529 = vadd.f32 %v506, %v528
    %530 = vmatmul.f32.gmra.mxu0 %v187
    %v531 = vpop.f32.mrf.mxu0
    %v532 = vadd.f32 %v509, %v531
    %533 = vdwg.mxu0
    %534 = vmatpush.msra.mxu0 %v269
    %535 = vmatpush.msra.mxu0 %v264
    %536 = vmatpush.msra.mxu0 %v259
    %537 = vmatpush.msra.mxu0 %v254
    %538 = vmatpush.msra.mxu0 %v249
    %539 = vmatpush.msra.mxu0 %v244
    %540 = vmatpush.msra.mxu0 %v239
    %541 = vmatpush.msra.mxu0 %v234
    %542 = vmatpush.msra.mxu0 %v229
    %543 = vmatpush.msra.mxu0 %v224
    %544 = vmatpush.msra.mxu0 %v219
    %545 = vmatpush.msra.mxu0 %v214
    %546 = vmatpush.msra.mxu0 %v209
    %547 = vmatpush.msra.mxu0 %v204
    %548 = vmatpush.msra.mxu0 %v199
    %549 = vmatpush.msra.mxu0 %v194
    %550 = vmatmul.f32.gmra.mxu0 %v182
    %v551 = vpop.f32.mrf.mxu0
    %v552 = vadd.f32 0.0, %v551
    %553 = vmatmul.f32.gmra.mxu0 %v186
    %v554 = vpop.f32.mrf.mxu0
    %v555 = vadd.f32 0.0, %v554
    %556 = vdwg.mxu0
    %557 = vmatpush.msra.mxu0 %v349
    %558 = vmatpush.msra.mxu0 %v344
    %559 = vmatpush.msra.mxu0 %v339
    %560 = vmatpush.msra.mxu0 %v334
    %561 = vmatpush.msra.mxu0 %v329
    %562 = vmatpush.msra.mxu0 %v324
    %563 = vmatpush.msra.mxu0 %v319
    %564 = vmatpush.msra.mxu0 %v314
    %565 = vmatpush.msra.mxu0 %v309
    %566 = vmatpush.msra.mxu0 %v304
    %567 = vmatpush.msra.mxu0 %v299
    %568 = vmatpush.msra.mxu0 %v294
    %569 = vmatpush.msra.mxu0 %v289
    %570 = vmatpush.msra.mxu0 %v284
    %571 = vmatpush.msra.mxu0 %v279
    %572 = vmatpush.msra.mxu0 %v274
    %573 = vmatmul.f32.gmra.mxu0 %v183
    %v574 = vpop.f32.mrf.mxu0
    %v575 = vadd.f32 %v552, %v574
    %576 = vmatmul.f32.gmra.mxu0 %v187
    %v577 = vpop.f32.mrf.mxu0
    %v578 = vadd.f32 %v555, %v577
    %579 = vdwg.mxu0
    %vm580 = vcmask 523264
    %581 = vst.msk [vmem:[#allocation2] sm:$0xff] %vm580, %v391
    %582 = vst.msk [vmem:[#allocation2 + $0x8] sm:$0xff] %vm580, %v394
    %585 = vrot.lane.b32.xlu0 %v391, 64
    %v586 = vpop.permute.xlu0 %585
    %587 = vrot.lane.b32.xlu0 %v394, 64
    %v588 = vpop.permute.xlu0 %587
    %591 = vst.msk [vmem:[#allocation2 + $0x10] sm:$0xff] %vm580, %v586
    %592 = vst.msk [vmem:[#allocation2 + $0x18] sm:$0xff] %vm580, %v588
    %593 = vst.msk [vmem:[#allocation2 + $0x20] sm:$0xff] %vm580, %v437
    %594 = vst.msk [vmem:[#allocation2 + $0x28] sm:$0xff] %vm580, %v440
    %597 = vrot.lane.b32.xlu0 %v437, 64
    %v598 = vpop.permute.xlu0 %597
    %599 = vrot.lane.b32.xlu0 %v440, 64
    %v600 = vpop.permute.xlu0 %599
    %603 = vst.msk [vmem:[#allocation2 + $0x30] sm:$0xff] %vm580, %v598
    %604 = vst.msk [vmem:[#allocation2 + $0x38] sm:$0xff] %vm580, %v600
    %605 = vst.msk [vmem:[#allocation2 + $0x40] sm:$0xff] %vm580, %v483
    %606 = vst.msk [vmem:[#allocation2 + $0x48] sm:$0xff] %vm580, %v486
    %609 = vrot.lane.b32.xlu0 %v483, 64
    %v610 = vpop.permute.xlu0 %609
    %611 = vrot.lane.b32.xlu0 %v486, 64
    %v612 = vpop.permute.xlu0 %611
    %615 = vst.msk [vmem:[#allocation2 + $0x50] sm:$0xff] %vm580, %v610
    %616 = vst.msk [vmem:[#allocation2 + $0x58] sm:$0xff] %vm580, %v612
    %617 = vst.msk [vmem:[#allocation2 + $0x60] sm:$0xff] %vm580, %v529
    %618 = vst.msk [vmem:[#allocation2 + $0x68] sm:$0xff] %vm580, %v532
    %621 = vrot.lane.b32.xlu0 %v529, 64
    %v622 = vpop.permute.xlu0 %621
    %623 = vrot.lane.b32.xlu0 %v532, 64
    %v624 = vpop.permute.xlu0 %623
    %627 = vst.msk [vmem:[#allocation2 + $0x70] sm:$0xff] %vm580, %v622
    %628 = vst.msk [vmem:[#allocation2 + $0x78] sm:$0xff] %vm580, %v624
    %629 = vst.msk [vmem:[#allocation2 + $0x80] sm:$0xff] %vm580, %v575
    %630 = vst.msk [vmem:[#allocation2 + $0x88] sm:$0xff] %vm580, %v578
    %v631 = vld [vmem:[%s1] sm:$0xff]
    %v632 = vld [vmem:[%s1 + $0x8] sm:$0xff]
    %v633 = vld [vmem:[%s1 + $0x10] sm:$0xff]
    %v634 = vld [vmem:[%s1 + $0x18] sm:$0xff]
    %v635 = vld [vmem:[%s1 + $0x20] sm:$0xff]
    %v636 = vld [vmem:[%s1 + $0x28] sm:$0xff]
    %v637 = vld [vmem:[%s1 + $0x30] sm:$0xff]
    %v638 = vld [vmem:[%s1 + $0x38] sm:$0xff]
    %v639 = vld [vmem:[%s1 + $0x40] sm:$0xff]
    %v640 = vld [vmem:[%s1 + $0x48] sm:$0xff]
    %v641 = vld [vmem:[%s1 + $0x50] sm:$0xff]
    %v642 = vld [vmem:[%s1 + $0x58] sm:$0xff]
    %v643 = vld [vmem:[%s1 + $0x60] sm:$0xff]
    %v644 = vld [vmem:[%s1 + $0x68] sm:$0xff]
    %v645 = vld [vmem:[%s1 + $0x70] sm:$0xff]
    %v646 = vld [vmem:[%s1 + $0x78] sm:$0xff]
    %v647 = vld [vmem:[%s1 + $0x80] sm:$0xff]
    %v648 = vld [vmem:[%s1 + $0x88] sm:$0xff]
    %v649 = vld [vmem:[%s1 + $0x90] sm:$0xff]
    %v650 = vld [vmem:[%s1 + $0x98] sm:$0xff]
    %v651 = vld [vmem:[%s1 + $0xa0] sm:$0xff]
    %v652 = vld [vmem:[%s1 + $0xa8] sm:$0xff]
    %v653 = vld [vmem:[%s1 + $0xb0] sm:$0xff]
    %v654 = vld [vmem:[%s1 + $0xb8] sm:$0xff]
    %v655 = vld [vmem:[%s1 + $0xc0] sm:$0xff]
    %v656 = vld [vmem:[%s1 + $0xc8] sm:$0xff]
    %v657 = vld [vmem:[%s1 + $0xd0] sm:$0xff]
    %v658 = vld [vmem:[%s1 + $0xd8] sm:$0xff]
    %v659 = vld [vmem:[%s1 + $0xe0] sm:$0xff]
    %v660 = vld [vmem:[%s1 + $0xe8] sm:$0xff]
    %v661 = vld [vmem:[%s1 + $0xf0] sm:$0xff]
    %v662 = vld [vmem:[%s1 + $0xf8] sm:$0xff]
    %v663 = vld [vmem:[%s1 + $0x100] sm:$0xff]
    %v664 = vld [vmem:[%s1 + $0x108] sm:$0xff]
    %v665 = vld [vmem:[%s1 + $0x110] sm:$0xff]
    %v666 = vld [vmem:[%s1 + $0x118] sm:$0xff]
    %v667 = vld [vmem:[%s1 + $0x120] sm:$0xff]
    %v668 = vld [vmem:[%s1 + $0x128] sm:$0xff]
    %v669 = vld [vmem:[%s1 + $0x130] sm:$0xff]
    %v670 = vld [vmem:[%s1 + $0x138] sm:$0xff]
    %v671 = vld [vmem:[%s1 + $0x140] sm:$0xff]
    %v672 = vld [vmem:[%s1 + $0x148] sm:$0xff]
    %v673 = vld [vmem:[%s1 + $0x150] sm:$0xff]
    %v674 = vld [vmem:[%s1 + $0x158] sm:$0xff]
    %v675 = vld [vmem:[%s1 + $0x160] sm:$0xff]
    %v676 = vld [vmem:[%s1 + $0x168] sm:$0xff]
    %v677 = vld [vmem:[%s1 + $0x170] sm:$0xff]
    %v678 = vld [vmem:[%s1 + $0x178] sm:$0xff]
    %v679 = vld [vmem:[%s1 + $0x180] sm:$0xff]
    %v680 = vld [vmem:[%s1 + $0x188] sm:$0xff]
    %v681 = vld [vmem:[%s1 + $0x190] sm:$0xff]
    %v682 = vld [vmem:[%s1 + $0x198] sm:$0xff]
    %v683 = vld [vmem:[%s1 + $0x1a0] sm:$0xff]
    %v684 = vld [vmem:[%s1 + $0x1a8] sm:$0xff]
    %v685 = vld [vmem:[%s1 + $0x1b0] sm:$0xff]
    %v686 = vld [vmem:[%s1 + $0x1b8] sm:$0xff]
    %v687 = vld [vmem:[%s1 + $0x1c0] sm:$0xff]
    %v688 = vld [vmem:[%s1 + $0x1c8] sm:$0xff]
    %v689 = vld [vmem:[%s1 + $0x1d0] sm:$0xff]
    %v690 = vld [vmem:[%s1 + $0x1d8] sm:$0xff]
    %v691 = vld [vmem:[%s1 + $0x1e0] sm:$0xff]
    %v692 = vld [vmem:[%s1 + $0x1e8] sm:$0xff]
    %v693 = vld [vmem:[%s1 + $0x1f0] sm:$0xff]
    %v694 = vld [vmem:[%s1 + $0x1f8] sm:$0xff]
    %v695 = vld [vmem:[%s1 + $0x200] sm:$0xff]
    %v696 = vld [vmem:[%s1 + $0x208] sm:$0xff]
    %v697 = vld [vmem:[%s1 + $0x210] sm:$0xff]
    %v698 = vld [vmem:[%s1 + $0x218] sm:$0xff]
    %v699 = vld [vmem:[%s1 + $0x220] sm:$0xff]
    %v700 = vld [vmem:[%s1 + $0x228] sm:$0xff]
    %v701 = vld [vmem:[%s1 + $0x230] sm:$0xff]
    %v702 = vld [vmem:[%s1 + $0x238] sm:$0xff]
    %v703 = vld [vmem:[%s1 + $0x240] sm:$0xff]
    %v704 = vld [vmem:[%s1 + $0x248] sm:$0xff]
    %v705 = vld [vmem:[%s1 + $0x250] sm:$0xff]
    %v706 = vld [vmem:[%s1 + $0x258] sm:$0xff]
    %v707 = vld [vmem:[%s1 + $0x260] sm:$0xff]
    %v708 = vld [vmem:[%s1 + $0x268] sm:$0xff]
    %v709 = vld [vmem:[%s1 + $0x270] sm:$0xff]
    %v710 = vld [vmem:[%s1 + $0x278] sm:$0xff]
    %v711 = vld [vmem:[%s1 + $0x280] sm:$0xff]
    %v712 = vld [vmem:[%s1 + $0x288] sm:$0xff]
    %v713 = vld [vmem:[%s1 + $0x290] sm:$0xff]
    %v714 = vld [vmem:[%s1 + $0x298] sm:$0xff]
    %v715 = vld [vmem:[%s1 + $0x2a0] sm:$0xff]
    %v716 = vld [vmem:[%s1 + $0x2a8] sm:$0xff]
    %v717 = vld [vmem:[%s1 + $0x2b0] sm:$0xff]
    %v718 = vld [vmem:[%s1 + $0x2b8] sm:$0xff]
    %v719 = vld [vmem:[%s1 + $0x2c0] sm:$0xff]
    %v720 = vld [vmem:[%s1 + $0x2c8] sm:$0xff]
    %v721 = vld [vmem:[%s1 + $0x2d0] sm:$0xff]
    %v722 = vld [vmem:[%s1 + $0x2d8] sm:$0xff]
    %v723 = vld [vmem:[%s1 + $0x2e0] sm:$0xff]
    %v724 = vld [vmem:[%s1 + $0x2e8] sm:$0xff]
    %v725 = vld [vmem:[%s1 + $0x2f0] sm:$0xff]
    %v726 = vld [vmem:[%s1 + $0x2f8] sm:$0xff]
    %v727 = vld [vmem:[%s1 + $0x300] sm:$0xff]
    %v728 = vld [vmem:[%s1 + $0x308] sm:$0xff]
    %v729 = vld [vmem:[%s1 + $0x310] sm:$0xff]
    %v730 = vld [vmem:[%s1 + $0x318] sm:$0xff]
    %v731 = vld [vmem:[%s1 + $0x320] sm:$0xff]
    %v732 = vld [vmem:[%s1 + $0x328] sm:$0xff]
    %v733 = vld [vmem:[%s1 + $0x330] sm:$0xff]
    %v734 = vld [vmem:[%s1 + $0x338] sm:$0xff]
    %v735 = vld [vmem:[%s1 + $0x340] sm:$0xff]
    %v736 = vld [vmem:[%s1 + $0x348] sm:$0xff]
    %v737 = vld [vmem:[%s1 + $0x350] sm:$0xff]
    %v738 = vld [vmem:[%s1 + $0x358] sm:$0xff]
    %v739 = vld [vmem:[%s1 + $0x360] sm:$0xff]
    %v740 = vld [vmem:[%s1 + $0x368] sm:$0xff]
    %v741 = vld [vmem:[%s1 + $0x370] sm:$0xff]
    %v742 = vld [vmem:[%s1 + $0x378] sm:$0xff]
    %v743 = vld [vmem:[%s1 + $0x380] sm:$0xff]
    %v744 = vld [vmem:[%s1 + $0x388] sm:$0xff]
    %v745 = vld [vmem:[%s1 + $0x390] sm:$0xff]
    %v746 = vld [vmem:[%s1 + $0x398] sm:$0xff]
    %v747 = vld [vmem:[%s1 + $0x3a0] sm:$0xff]
    %v748 = vld [vmem:[%s1 + $0x3a8] sm:$0xff]
    %v749 = vld [vmem:[%s1 + $0x3b0] sm:$0xff]
    %v750 = vld [vmem:[%s1 + $0x3b8] sm:$0xff]
    %v751 = vld [vmem:[%s1 + $0x3c0] sm:$0xff]
    %v752 = vld [vmem:[%s1 + $0x3c8] sm:$0xff]
    %v753 = vld [vmem:[%s1 + $0x3d0] sm:$0xff]
    %v754 = vld [vmem:[%s1 + $0x3d8] sm:$0xff]
    %v755 = vld [vmem:[%s1 + $0x3e0] sm:$0xff]
    %v756 = vld [vmem:[%s1 + $0x3e8] sm:$0xff]
    %v757 = vld [vmem:[%s1 + $0x3f0] sm:$0xff]
    %v758 = vld [vmem:[%s1 + $0x3f8] sm:$0xff]
    %v759 = vld [vmem:[%s1 + $0x400] sm:$0xff]
    %v760 = vld [vmem:[%s1 + $0x408] sm:$0xff]
    %v761 = vld [vmem:[%s1 + $0x410] sm:$0xff]
    %v762 = vld [vmem:[%s1 + $0x418] sm:$0xff]
    %v763 = vld [vmem:[%s1 + $0x420] sm:$0xff]
    %v764 = vld [vmem:[%s1 + $0x428] sm:$0xff]
    %v765 = vld [vmem:[%s1 + $0x430] sm:$0xff]
    %v766 = vld [vmem:[%s1 + $0x438] sm:$0xff]
    %v767 = vld [vmem:[%s1 + $0x440] sm:$0xff]
    %v768 = vld [vmem:[%s1 + $0x448] sm:$0xff]
    %v769 = vld [vmem:[%s1 + $0x450] sm:$0xff]
    %v770 = vld [vmem:[%s1 + $0x458] sm:$0xff]
    %v771 = vld [vmem:[%s1 + $0x460] sm:$0xff]
    %v772 = vld [vmem:[%s1 + $0x468] sm:$0xff]
    %v773 = vld [vmem:[%s1 + $0x470] sm:$0xff]
    %v774 = vld [vmem:[%s1 + $0x478] sm:$0xff]
    %v775 = vld [vmem:[%s1 + $0x480] sm:$0xff]
    %v776 = vld [vmem:[%s1 + $0x488] sm:$0xff]
    %v777 = vld [vmem:[%s1 + $0x490] sm:$0xff]
    %v778 = vld [vmem:[%s1 + $0x498] sm:$0xff]
    %v779 = vld [vmem:[%s1 + $0x4a0] sm:$0xff]
    %v780 = vld [vmem:[%s1 + $0x4a8] sm:$0xff]
    %v781 = vld [vmem:[%s1 + $0x4b0] sm:$0xff]
    %v782 = vld [vmem:[%s1 + $0x4b8] sm:$0xff]
    %v783 = vld [vmem:[%s1 + $0x4c0] sm:$0xff]
    %v784 = vld [vmem:[%s1 + $0x4c8] sm:$0xff]
    %v785 = vld [vmem:[%s1 + $0x4d0] sm:$0xff]
    %v786 = vld [vmem:[%s1 + $0x4d8] sm:$0xff]
    %v787 = vld [vmem:[%s1 + $0x4e0] sm:$0xff]
    %v788 = vld [vmem:[%s1 + $0x4e8] sm:$0xff]
    %v789 = vld [vmem:[%s1 + $0x4f0] sm:$0xff]
    %v790 = vld [vmem:[%s1 + $0x4f8] sm:$0xff]
    %791 = vmatpush.msra.mxu0 %v706
    %792 = vmatpush.msra.mxu0 %v701
    %793 = vmatpush.msra.mxu0 %v696
    %794 = vmatpush.msra.mxu0 %v691
    %795 = vmatpush.msra.mxu0 %v686
    %796 = vmatpush.msra.mxu0 %v681
    %797 = vmatpush.msra.mxu0 %v676
    %798 = vmatpush.msra.mxu0 %v671
    %799 = vmatpush.msra.mxu0 %v666
    %800 = vmatpush.msra.mxu0 %v661
    %801 = vmatpush.msra.mxu0 %v656
    %802 = vmatpush.msra.mxu0 %v651
    %803 = vmatpush.msra.mxu0 %v646
    %804 = vmatpush.msra.mxu0 %v641
    %805 = vmatpush.msra.mxu0 %v636
    %806 = vmatpush.msra.mxu0 %v631
    %807 = vmatmul.f32.gmra.mxu0 %v184
    %v808 = vpop.f32.mrf.mxu0
    %v809 = vadd.f32 0.0, %v808
    %810 = vmatmul.f32.gmra.mxu0 %v188
    %v811 = vpop.f32.mrf.mxu0
    %v812 = vadd.f32 0.0, %v811
    %813 = vdwg.mxu0
    %814 = vmatpush.msra.mxu0 %v786
    %815 = vmatpush.msra.mxu0 %v781
    %816 = vmatpush.msra.mxu0 %v776
    %817 = vmatpush.msra.mxu0 %v771
    %818 = vmatpush.msra.mxu0 %v766
    %819 = vmatpush.msra.mxu0 %v761
    %820 = vmatpush.msra.mxu0 %v756
    %821 = vmatpush.msra.mxu0 %v751
    %822 = vmatpush.msra.mxu0 %v746
    %823 = vmatpush.msra.mxu0 %v741
    %824 = vmatpush.msra.mxu0 %v736
    %825 = vmatpush.msra.mxu0 %v731
    %826 = vmatpush.msra.mxu0 %v726
    %827 = vmatpush.msra.mxu0 %v721
    %828 = vmatpush.msra.mxu0 %v716
    %829 = vmatpush.msra.mxu0 %v711
    %830 = vmatmul.f32.gmra.mxu0 %v185
    %v831 = vpop.f32.mrf.mxu0
    %v832 = vadd.f32 %v809, %v831
    %833 = vmatmul.f32.gmra.mxu0 %v189
    %v834 = vpop.f32.mrf.mxu0
    %v835 = vadd.f32 %v812, %v834
    %836 = vdwg.mxu0
    %837 = vmatpush.msra.mxu0 %v707
    %838 = vmatpush.msra.mxu0 %v702
    %839 = vmatpush.msra.mxu0 %v697
    %840 = vmatpush.msra.mxu0 %v692
    %841 = vmatpush.msra.mxu0 %v687
    %842 = vmatpush.msra.mxu0 %v682
    %843 = vmatpush.msra.mxu0 %v677
    %844 = vmatpush.msra.mxu0 %v672
    %845 = vmatpush.msra.mxu0 %v667
    %846 = vmatpush.msra.mxu0 %v662
    %847 = vmatpush.msra.mxu0 %v657
    %848 = vmatpush.msra.mxu0 %v652
    %849 = vmatpush.msra.mxu0 %v647
    %850 = vmatpush.msra.mxu0 %v642
    %851 = vmatpush.msra.mxu0 %v637
    %852 = vmatpush.msra.mxu0 %v632
    %853 = vmatmul.f32.gmra.mxu0 %v184
    %v854 = vpop.f32.mrf.mxu0
    %v855 = vadd.f32 0.0, %v854
    %856 = vmatmul.f32.gmra.mxu0 %v188
    %v857 = vpop.f32.mrf.mxu0
    %v858 = vadd.f32 0.0, %v857
    %859 = vdwg.mxu0
    %860 = vmatpush.msra.mxu0 %v787
    %861 = vmatpush.msra.mxu0 %v782
    %862 = vmatpush.msra.mxu0 %v777
    %863 = vmatpush.msra.mxu0 %v772
    %864 = vmatpush.msra.mxu0 %v767
    %865 = vmatpush.msra.mxu0 %v762
    %866 = vmatpush.msra.mxu0 %v757
    %867 = vmatpush.msra.mxu0 %v752
    %868 = vmatpush.msra.mxu0 %v747
    %869 = vmatpush.msra.mxu0 %v742
    %870 = vmatpush.msra.mxu0 %v737
    %871 = vmatpush.msra.mxu0 %v732
    %872 = vmatpush.msra.mxu0 %v727
    %873 = vmatpush.msra.mxu0 %v722
    %874 = vmatpush.msra.mxu0 %v717
    %875 = vmatpush.msra.mxu0 %v712
    %876 = vmatmul.f32.gmra.mxu0 %v185
    %v877 = vpop.f32.mrf.mxu0
    %v878 = vadd.f32 %v855, %v877
    %879 = vmatmul.f32.gmra.mxu0 %v189
    %v880 = vpop.f32.mrf.mxu0
    %v881 = vadd.f32 %v858, %v880
    %882 = vdwg.mxu0
    %883 = vmatpush.msra.mxu0 %v708
    %884 = vmatpush.msra.mxu0 %v703
    %885 = vmatpush.msra.mxu0 %v698
    %886 = vmatpush.msra.mxu0 %v693
    %887 = vmatpush.msra.mxu0 %v688
    %888 = vmatpush.msra.mxu0 %v683
    %889 = vmatpush.msra.mxu0 %v678
    %890 = vmatpush.msra.mxu0 %v673
    %891 = vmatpush.msra.mxu0 %v668
    %892 = vmatpush.msra.mxu0 %v663
    %893 = vmatpush.msra.mxu0 %v658
    %894 = vmatpush.msra.mxu0 %v653
    %895 = vmatpush.msra.mxu0 %v648
    %896 = vmatpush.msra.mxu0 %v643
    %897 = vmatpush.msra.mxu0 %v638
    %898 = vmatpush.msra.mxu0 %v633
    %899 = vmatmul.f32.gmra.mxu0 %v184
    %v900 = vpop.f32.mrf.mxu0
    %v901 = vadd.f32 0.0, %v900
    %902 = vmatmul.f32.gmra.mxu0 %v188
    %v903 = vpop.f32.mrf.mxu0
    %v904 = vadd.f32 0.0, %v903
    %905 = vdwg.mxu0
    %906 = vmatpush.msra.mxu0 %v788
    %907 = vmatpush.msra.mxu0 %v783
    %908 = vmatpush.msra.mxu0 %v778
    %909 = vmatpush.msra.mxu0 %v773
    %910 = vmatpush.msra.mxu0 %v768
    %911 = vmatpush.msra.mxu0 %v763
    %912 = vmatpush.msra.mxu0 %v758
    %913 = vmatpush.msra.mxu0 %v753
    %914 = vmatpush.msra.mxu0 %v748
    %915 = vmatpush.msra.mxu0 %v743
    %916 = vmatpush.msra.mxu0 %v738
    %917 = vmatpush.msra.mxu0 %v733
    %918 = vmatpush.msra.mxu0 %v728
    %919 = vmatpush.msra.mxu0 %v723
    %920 = vmatpush.msra.mxu0 %v718
    %921 = vmatpush.msra.mxu0 %v713
    %922 = vmatmul.f32.gmra.mxu0 %v185
    %v923 = vpop.f32.mrf.mxu0
    %v924 = vadd.f32 %v901, %v923
    %925 = vmatmul.f32.gmra.mxu0 %v189
    %v926 = vpop.f32.mrf.mxu0
    %v927 = vadd.f32 %v904, %v926
    %928 = vdwg.mxu0
    %929 = vmatpush.msra.mxu0 %v709
    %930 = vmatpush.msra.mxu0 %v704
    %931 = vmatpush.msra.mxu0 %v699
    %932 = vmatpush.msra.mxu0 %v694
    %933 = vmatpush.msra.mxu0 %v689
    %934 = vmatpush.msra.mxu0 %v684
    %935 = vmatpush.msra.mxu0 %v679
    %936 = vmatpush.msra.mxu0 %v674
    %937 = vmatpush.msra.mxu0 %v669
    %938 = vmatpush.msra.mxu0 %v664
    %939 = vmatpush.msra.mxu0 %v659
    %940 = vmatpush.msra.mxu0 %v654
    %941 = vmatpush.msra.mxu0 %v649
    %942 = vmatpush.msra.mxu0 %v644
    %943 = vmatpush.msra.mxu0 %v639
    %944 = vmatpush.msra.mxu0 %v634
    %945 = vmatmul.f32.gmra.mxu0 %v184
    %v946 = vpop.f32.mrf.mxu0
    %v947 = vadd.f32 0.0, %v946
    %948 = vmatmul.f32.gmra.mxu0 %v188
    %v949 = vpop.f32.mrf.mxu0
    %v950 = vadd.f32 0.0, %v949
    %951 = vdwg.mxu0
    %952 = vmatpush.msra.mxu0 %v789
    %953 = vmatpush.msra.mxu0 %v784
    %954 = vmatpush.msra.mxu0 %v779
    %955 = vmatpush.msra.mxu0 %v774
    %956 = vmatpush.msra.mxu0 %v769
    %957 = vmatpush.msra.mxu0 %v764
    %958 = vmatpush.msra.mxu0 %v759
    %959 = vmatpush.msra.mxu0 %v754
    %960 = vmatpush.msra.mxu0 %v749
    %961 = vmatpush.msra.mxu0 %v744
    %962 = vmatpush.msra.mxu0 %v739
    %963 = vmatpush.msra.mxu0 %v734
    %964 = vmatpush.msra.mxu0 %v729
    %965 = vmatpush.msra.mxu0 %v724
    %966 = vmatpush.msra.mxu0 %v719
    %967 = vmatpush.msra.mxu0 %v714
    %968 = vmatmul.f32.gmra.mxu0 %v185
    %v969 = vpop.f32.mrf.mxu0
    %v970 = vadd.f32 %v947, %v969
    %971 = vmatmul.f32.gmra.mxu0 %v189
    %v972 = vpop.f32.mrf.mxu0
    %v973 = vadd.f32 %v950, %v972
    %974 = vdwg.mxu0
    %975 = vmatpush.msra.mxu0 %v710
    %976 = vmatpush.msra.mxu0 %v705
    %977 = vmatpush.msra.mxu0 %v700
    %978 = vmatpush.msra.mxu0 %v695
    %979 = vmatpush.msra.mxu0 %v690
    %980 = vmatpush.msra.mxu0 %v685
    %981 = vmatpush.msra.mxu0 %v680
    %982 = vmatpush.msra.mxu0 %v675
    %983 = vmatpush.msra.mxu0 %v670
    %984 = vmatpush.msra.mxu0 %v665
    %985 = vmatpush.msra.mxu0 %v660
    %986 = vmatpush.msra.mxu0 %v655
    %987 = vmatpush.msra.mxu0 %v650
    %988 = vmatpush.msra.mxu0 %v645
    %989 = vmatpush.msra.mxu0 %v640
    %990 = vmatpush.msra.mxu0 %v635
    %991 = vmatmul.f32.gmra.mxu0 %v184
    %v992 = vpop.f32.mrf.mxu0
    %v993 = vadd.f32 0.0, %v992
    %994 = vmatmul.f32.gmra.mxu0 %v188
    %v995 = vpop.f32.mrf.mxu0
    %v996 = vadd.f32 0.0, %v995
    %997 = vdwg.mxu0
    %998 = vmatpush.msra.mxu0 %v790
    %999 = vmatpush.msra.mxu0 %v785
    %1000 = vmatpush.msra.mxu0 %v780
    %1001 = vmatpush.msra.mxu0 %v775
    %1002 = vmatpush.msra.mxu0 %v770
    %1003 = vmatpush.msra.mxu0 %v765
    %1004 = vmatpush.msra.mxu0 %v760
    %1005 = vmatpush.msra.mxu0 %v755
    %1006 = vmatpush.msra.mxu0 %v750
    %1007 = vmatpush.msra.mxu0 %v745
    %1008 = vmatpush.msra.mxu0 %v740
    %1009 = vmatpush.msra.mxu0 %v735
    %1010 = vmatpush.msra.mxu0 %v730
    %1011 = vmatpush.msra.mxu0 %v725
    %1012 = vmatpush.msra.mxu0 %v720
    %1013 = vmatpush.msra.mxu0 %v715
    %1014 = vmatmul.f32.gmra.mxu0 %v185
    %v1015 = vpop.f32.mrf.mxu0
    %v1016 = vadd.f32 %v993, %v1015
    %1017 = vmatmul.f32.gmra.mxu0 %v189
    %v1018 = vpop.f32.mrf.mxu0
    %v1019 = vadd.f32 %v996, %v1018
    %1020 = vdwg.mxu0
    %1023 = vrot.lane.b32.xlu0 %v832, 64
    %v1024 = vpop.permute.xlu0 %1023
    %1025 = vrot.lane.b32.xlu0 %v835, 64
    %v1026 = vpop.permute.xlu0 %1025
    %vm1029 = vcmask 1048064
    %1030 = vst.msk [vmem:[#allocation2] sm:$0xff] %vm1029, %v1024
    %1031 = vst.msk [vmem:[#allocation2 + $0x8] sm:$0xff] %vm1029, %v1026
    %1032 = vst.msk [vmem:[#allocation2 + $0x10] sm:$0xff] %vm1029, %v832
    %1033 = vst.msk [vmem:[#allocation2 + $0x18] sm:$0xff] %vm1029, %v835
    %1036 = vrot.lane.b32.xlu0 %v878, 64
    %v1037 = vpop.permute.xlu0 %1036
    %1038 = vrot.lane.b32.xlu0 %v881, 64
    %v1039 = vpop.permute.xlu0 %1038
    %1042 = vst.msk [vmem:[#allocation2 + $0x20] sm:$0xff] %vm1029, %v1037
    %1043 = vst.msk [vmem:[#allocation2 + $0x28] sm:$0xff] %vm1029, %v1039
    %1044 = vst.msk [vmem:[#allocation2 + $0x30] sm:$0xff] %vm1029, %v878
    %1045 = vst.msk [vmem:[#allocation2 + $0x38] sm:$0xff] %vm1029, %v881
    %1048 = vrot.lane.b32.xlu0 %v924, 64
    %v1049 = vpop.permute.xlu0 %1048
    %1050 = vrot.lane.b32.xlu0 %v927, 64
    %v1051 = vpop.permute.xlu0 %1050
    %1054 = vst.msk [vmem:[#allocation2 + $0x40] sm:$0xff] %vm1029, %v1049
    %1055 = vst.msk [vmem:[#allocation2 + $0x48] sm:$0xff] %vm1029, %v1051
    %1056 = vst.msk [vmem:[#allocation2 + $0x50] sm:$0xff] %vm1029, %v924
    %1057 = vst.msk [vmem:[#allocation2 + $0x58] sm:$0xff] %vm1029, %v927
    %1060 = vrot.lane.b32.xlu0 %v970, 64
    %v1061 = vpop.permute.xlu0 %1060
    %1062 = vrot.lane.b32.xlu0 %v973, 64
    %v1063 = vpop.permute.xlu0 %1062
    %1066 = vst.msk [vmem:[#allocation2 + $0x60] sm:$0xff] %vm1029, %v1061
    %1067 = vst.msk [vmem:[#allocation2 + $0x68] sm:$0xff] %vm1029, %v1063
    %1068 = vst.msk [vmem:[#allocation2 + $0x70] sm:$0xff] %vm1029, %v970
    %1069 = vst.msk [vmem:[#allocation2 + $0x78] sm:$0xff] %vm1029, %v973
    %1072 = vrot.lane.b32.xlu0 %v1016, 64
    %v1073 = vpop.permute.xlu0 %1072
    %1074 = vrot.lane.b32.xlu0 %v1019, 64
    %v1075 = vpop.permute.xlu0 %1074
    %1078 = vst.msk [vmem:[#allocation2 + $0x80] sm:$0xff] %vm1029, %v1073
    %1079 = vst.msk [vmem:[#allocation2 + $0x88] sm:$0xff] %vm1029, %v1075
    %v1080 = vld [vmem:[%s4] sm:$0xff]
    %v1081 = vld [vmem:[%s4 + $0x8] sm:$0xff]
    %v1082 = vld [vmem:[%s4 + $0x10] sm:$0xff]
    %v1083 = vld [vmem:[%s4 + $0x18] sm:$0xff]
    %v1084 = vld [vmem:[#allocation2] sm:$0xff]
    %v1085 = vld [vmem:[#allocation2 + $0x8] sm:$0xff]
    %v1086 = vld [vmem:[#allocation2 + $0x10] sm:$0xff]
    %v1087 = vld [vmem:[#allocation2 + $0x18] sm:$0xff]
    %v1088 = vld [vmem:[#allocation2 + $0x20] sm:$0xff]
    %v1089 = vld [vmem:[#allocation2 + $0x28] sm:$0xff]
    %v1090 = vld [vmem:[#allocation2 + $0x30] sm:$0xff]
    %v1091 = vld [vmem:[#allocation2 + $0x38] sm:$0xff]
    %v1092 = vld [vmem:[#allocation2 + $0x40] sm:$0xff]
    %v1093 = vld [vmem:[#allocation2 + $0x48] sm:$0xff]
    %v1094 = vld [vmem:[#allocation2 + $0x50] sm:$0xff]
    %v1095 = vld [vmem:[#allocation2 + $0x58] sm:$0xff]
    %v1096 = vld [vmem:[#allocation2 + $0x60] sm:$0xff]
    %v1097 = vld [vmem:[#allocation2 + $0x68] sm:$0xff]
    %v1098 = vld [vmem:[#allocation2 + $0x70] sm:$0xff]
    %v1099 = vld [vmem:[#allocation2 + $0x78] sm:$0xff]
    %v1100 = vld [vmem:[#allocation2 + $0x80] sm:$0xff]
    %v1101 = vld [vmem:[#allocation2 + $0x88] sm:$0xff]
    %v1102 = vld [vmem:[%s5] sm:$0xff]
    %v1103 = vld [vmem:[%s5 + $0x8] sm:$0xff]
    %1105 = vset.pattern.permute.xlu0 0
    %1106 = vperm.xlu0 %1105, %v1102
    %v1107 = vpop.permute.xlu0 %1106
    %1110 = vset.pattern.permute.xlu0 0
    %1111 = vperm.xlu0 %1110, %v1103
    %v1112 = vpop.permute.xlu0 %1111
    %vm1114 = vcmask 130048
    %v1116 = vsel %vm1114, %v1081, 0
    %v1119 = vsel %vm1114, %v1083, 0
    %1121 = vmatpush.msra.mxu0 %v1099
    %1122 = vmatpush.msra.mxu0 %v1098
    %1123 = vmatpush.msra.mxu0 %v1097
    %1124 = vmatpush.msra.mxu0 %v1096
    %1125 = vmatpush.msra.mxu0 %v1095
    %1126 = vmatpush.msra.mxu0 %v1094
    %1127 = vmatpush.msra.mxu0 %v1093
    %1128 = vmatpush.msra.mxu0 %v1092
    %1129 = vmatpush.msra.mxu0 %v1091
    %1130 = vmatpush.msra.mxu0 %v1090
    %1131 = vmatpush.msra.mxu0 %v1089
    %1132 = vmatpush.msra.mxu0 %v1088
    %1133 = vmatpush.msra.mxu0 %v1087
    %1134 = vmatpush.msra.mxu0 %v1086
    %1135 = vmatpush.msra.mxu0 %v1085
    %1136 = vmatpush.msra.mxu0 %v1084
    %1137 = vmatmul.f32.gmra.mxu0 %v1080
    %v1138 = vpop.f32.mrf.mxu0
    %v1139 = vadd.f32 %v1107, %v1138
    %1140 = vmatmul.f32.gmra.mxu0 %v1082
    %v1141 = vpop.f32.mrf.mxu0
    %v1142 = vadd.f32 %v1112, %v1141
    %1143 = vdwg.mxu0
    %1144 = vmatpush.msra.mxu0 0.0
    %1145 = vmatpush.msra.mxu0 0.0
    %1146 = vmatpush.msra.mxu0 0.0
    %1147 = vmatpush.msra.mxu0 0.0
    %1148 = vmatpush.msra.mxu0 0.0
    %1149 = vmatpush.msra.mxu0 0.0
    %1150 = vmatpush.msra.mxu0 0.0
    %1151 = vmatpush.msra.mxu0 0.0
    %1152 = vmatpush.msra.mxu0 0.0
    %1153 = vmatpush.msra.mxu0 0.0
    %1154 = vmatpush.msra.mxu0 0.0
    %1155 = vmatpush.msra.mxu0 0.0
    %1156 = vmatpush.msra.mxu0 0.0
    %1157 = vmatpush.msra.mxu0 0.0
    %1158 = vmatpush.msra.mxu0 %v1101
    %1159 = vmatpush.msra.mxu0 %v1100
    %1160 = vmatmul.f32.gmra.mxu0 %v1116
    %v1161 = vpop.f32.mrf.mxu0
    %v1162 = vadd.f32 %v1139, %v1161
    %1163 = vmatmul.f32.gmra.mxu0 %v1119
    %v1164 = vpop.f32.mrf.mxu0
    %v1165 = vadd.f32 %v1142, %v1164
    %1166 = vdwg.mxu0
    %v1167 = vmax.f32 %v1162, 0.0
    %v1168 = vmax.f32 %v1165, 0.0
    %vm1169 = vcmask 516096
    %1170 = vst.msk [vmem:[#allocation3] sm:$0x1] %vm1169, %v1167
    %v1172 = vrot.slane %v1167, 7
    %v1173 = vrot.slane %v1172, 2
    %1174 = vrot.lane.b32.xlu0 %v1173, 64
    %v1175 = vpop.permute.xlu0 %1174
    %vm1177 = vcmask 1040896
    %1178 = vst.msk [vmem:[#allocation3] sm:$0x1] %vm1177, %v1175
    %1179 = vst.sshfl [vmem:[#allocation1] sm:$0xff pattern:$0x73625140] %v1167
    %s1180 = scalar_lea.vmem [#allocation1], 1
    %v1181 = vld [vmem:[%s1180] ss:$4 sm:$0xff]
    %1183 = vst.msk [vmem:[#allocation3 + $0x2] sm:$0x1] %vm1169, %v1181
    %1184 = vst.sshfl [vmem:[#allocation1] sm:$0xff pattern:$0x73625140] %v1167
    %s1185 = scalar_lea.vmem [#allocation1], 1
    %v1186 = vld [vmem:[%s1185] ss:$4 sm:$0xff]
    %v1187 = vrot.slane %v1186, 7
    %v1188 = vrot.slane %v1187, 2
    %1189 = vrot.lane.b32.xlu0 %v1188, 64
    %v1190 = vpop.permute.xlu0 %1189
    %1192 = vst.msk [vmem:[#allocation3 + $0x2] sm:$0x1] %vm1177, %v1190
    %1193 = vst.sshfl [vmem:[#allocation1] sm:$0xff pattern:$0x73625140] %v1167
    %s1194 = scalar_lea.vmem [#allocation1], 2
    %v1195 = vld [vmem:[%s1194] ss:$4 sm:$0xff]
    %1197 = vst.msk [vmem:[#allocation3 + $0x4] sm:$0x1] %vm1169, %v1195
    %1198 = vst.sshfl [vmem:[#allocation1] sm:$0xff pattern:$0x73625140] %v1167
    %s1199 = scalar_lea.vmem [#allocation1], 2
    %v1200 = vld [vmem:[%s1199] ss:$4 sm:$0xff]
    %v1201 = vrot.slane %v1200, 7
    %v1202 = vrot.slane %v1201, 2
    %1203 = vrot.lane.b32.xlu0 %v1202, 64
    %v1204 = vpop.permute.xlu0 %1203
    %1206 = vst.msk [vmem:[#allocation3 + $0x4] sm:$0x1] %vm1177, %v1204
    %1207 = vst.sshfl [vmem:[#allocation1] sm:$0xff pattern:$0x73625140] %v1167
    %s1208 = scalar_lea.vmem [#allocation1], 3
    %v1209 = vld [vmem:[%s1208] ss:$4 sm:$0xff]
    %1211 = vst.msk [vmem:[#allocation3 + $0x6] sm:$0x1] %vm1169, %v1209
    %1212 = vst.sshfl [vmem:[#allocation1] sm:$0xff pattern:$0x73625140] %v1167
    %s1213 = scalar_lea.vmem [#allocation1], 3
    %v1214 = vld [vmem:[%s1213] ss:$4 sm:$0xff]
    %v1215 = vrot.slane %v1214, 7
    %v1216 = vrot.slane %v1215, 2
    %1217 = vrot.lane.b32.xlu0 %v1216, 64
    %v1218 = vpop.permute.xlu0 %1217
    %1220 = vst.msk [vmem:[#allocation3 + $0x6] sm:$0x1] %vm1177, %v1218
    %1221 = vst.msk [vmem:[#allocation3 + $0x8] sm:$0x1] %vm1169, %v1168
    %v1223 = vrot.slane %v1168, 7
    %v1224 = vrot.slane %v1223, 2
    %1225 = vrot.lane.b32.xlu0 %v1224, 64
    %v1226 = vpop.permute.xlu0 %1225
    %1228 = vst.msk [vmem:[#allocation3 + $0x8] sm:$0x1] %vm1177, %v1226
    %1229 = vst.sshfl [vmem:[#allocation1] sm:$0xff pattern:$0x73625140] %v1168
    %s1230 = scalar_lea.vmem [#allocation1], 1
    %v1231 = vld [vmem:[%s1230] ss:$4 sm:$0xff]
    %1233 = vst.msk [vmem:[#allocation3 + $0xa] sm:$0x1] %vm1169, %v1231
    %1234 = vst.sshfl [vmem:[#allocation1] sm:$0xff pattern:$0x73625140] %v1168
    %s1235 = scalar_lea.vmem [#allocation1], 1
    %v1236 = vld [vmem:[%s1235] ss:$4 sm:$0xff]
    %v1237 = vrot.slane %v1236, 7
    %v1238 = vrot.slane %v1237, 2
    %1239 = vrot.lane.b32.xlu0 %v1238, 64
    %v1240 = vpop.permute.xlu0 %1239
    %1242 = vst.msk [vmem:[#allocation3 + $0xa] sm:$0x1] %vm1177, %v1240
    %1243 = vst.sshfl [vmem:[#allocation1] sm:$0xff pattern:$0x73625140] %v1168
    %s1244 = scalar_lea.vmem [#allocation1], 2
    %v1245 = vld [vmem:[%s1244] ss:$4 sm:$0xff]
    %1247 = vst.msk [vmem:[#allocation3 + $0xc] sm:$0x1] %vm1169, %v1245
    %1248 = vst.sshfl [vmem:[#allocation1] sm:$0xff pattern:$0x73625140] %v1168
    %s1249 = scalar_lea.vmem [#allocation1], 2
    %v1250 = vld [vmem:[%s1249] ss:$4 sm:$0xff]
    %v1251 = vrot.slane %v1250, 7
    %v1252 = vrot.slane %v1251, 2
    %1253 = vrot.lane.b32.xlu0 %v1252, 64
    %v1254 = vpop.permute.xlu0 %1253
    %1256 = vst.msk [vmem:[#allocation3 + $0xc] sm:$0x1] %vm1177, %v1254
    %1257 = vst.sshfl [vmem:[#allocation1] sm:$0xff pattern:$0x73625140] %v1168
    %s1258 = scalar_lea.vmem [#allocation1], 3
    %v1259 = vld [vmem:[%s1258] ss:$4 sm:$0xff]
    %1261 = vst.msk [vmem:[#allocation3 + $0xe] sm:$0x1] %vm1169, %v1259
    %1262 = vst.sshfl [vmem:[#allocation1] sm:$0xff pattern:$0x73625140] %v1168
    %s1263 = scalar_lea.vmem [#allocation1], 3
    %v1264 = vld [vmem:[%s1263] ss:$4 sm:$0xff]
    %v1265 = vrot.slane %v1264, 7
    %v1266 = vrot.slane %v1265, 2
    %1267 = vrot.lane.b32.xlu0 %v1266, 64
    %v1268 = vpop.permute.xlu0 %1267
    %1270 = vst.msk [vmem:[#allocation3 + $0xe] sm:$0x1] %vm1177, %v1268
    %1271 = vrot.lane.b32.xlu0 %v1167, 64
    %v1272 = vpop.permute.xlu0 %1271
    %1274 = vst.msk [vmem:[#allocation3 + $0x1] sm:$0x1] %vm1169, %v1272
    %1276 = vst.msk [vmem:[#allocation3 + $0x1] sm:$0x1] %vm1177, %v1173
    %1277 = vst.sshfl [vmem:[#allocation1] sm:$0xff pattern:$0x73625140] %v1167
    %s1278 = scalar_lea.vmem [#allocation1], 1
    %v1279 = vld [vmem:[%s1278] ss:$4 sm:$0xff]
    %1280 = vrot.lane.b32.xlu0 %v1279, 64
    %v1281 = vpop.permute.xlu0 %1280
    %1283 = vst.msk [vmem:[#allocation3 + $0x3] sm:$0x1] %vm1169, %v1281
    %1284 = vst.sshfl [vmem:[#allocation1] sm:$0xff pattern:$0x73625140] %v1167
    %s1285 = scalar_lea.vmem [#allocation1], 1
    %v1286 = vld [vmem:[%s1285] ss:$4 sm:$0xff]
    %v1287 = vrot.slane %v1286, 7
    %v1288 = vrot.slane %v1287, 2
    %1290 = vst.msk [vmem:[#allocation3 + $0x3] sm:$0x1] %vm1177, %v1288
    %1291 = vst.sshfl [vmem:[#allocation1] sm:$0xff pattern:$0x73625140] %v1167
    %s1292 = scalar_lea.vmem [#allocation1], 2
    %v1293 = vld [vmem:[%s1292] ss:$4 sm:$0xff]
    %1294 = vrot.lane.b32.xlu0 %v1293, 64
    %v1295 = vpop.permute.xlu0 %1294
    %1297 = vst.msk [vmem:[#allocation3 + $0x5] sm:$0x1] %vm1169, %v1295
    %1298 = vst.sshfl [vmem:[#allocation1] sm:$0xff pattern:$0x73625140] %v1167
    %s1299 = scalar_lea.vmem [#allocation1], 2
    %v1300 = vld [vmem:[%s1299] ss:$4 sm:$0xff]
    %v1301 = vrot.slane %v1300, 7
    %v1302 = vrot.slane %v1301, 2
    %1304 = vst.msk [vmem:[#allocation3 + $0x5] sm:$0x1] %vm1177, %v1302
    %1305 = vst.sshfl [vmem:[#allocation1] sm:$0xff pattern:$0x73625140] %v1167
    %s1306 = scalar_lea.vmem [#allocation1], 3
    %v1307 = vld [vmem:[%s1306] ss:$4 sm:$0xff]
    %1308 = vrot.lane.b32.xlu0 %v1307, 64
    %v1309 = vpop.permute.xlu0 %1308
    %1311 = vst.msk [vmem:[#allocation3 + $0x7] sm:$0x1] %vm1169, %v1309
    %1312 = vst.sshfl [vmem:[#allocation1] sm:$0xff pattern:$0x73625140] %v1167
    %s1313 = scalar_lea.vmem [#allocation1], 3
    %v1314 = vld [vmem:[%s1313] ss:$4 sm:$0xff]
    %v1315 = vrot.slane %v1314, 7
    %v1316 = vrot.slane %v1315, 2
    %1318 = vst.msk [vmem:[#allocation3 + $0x7] sm:$0x1] %vm1177, %v1316
    %1319 = vrot.lane.b32.xlu0 %v1168, 64
    %v1320 = vpop.permute.xlu0 %1319
    %1322 = vst.msk [vmem:[#allocation3 + $0x9] sm:$0x1] %vm1169, %v1320
    %1324 = vst.msk [vmem:[#allocation3 + $0x9] sm:$0x1] %vm1177, %v1224
    %1325 = vst.sshfl [vmem:[#allocation1] sm:$0xff pattern:$0x73625140] %v1168
    %s1326 = scalar_lea.vmem [#allocation1], 1
    %v1327 = vld [vmem:[%s1326] ss:$4 sm:$0xff]
    %1328 = vrot.lane.b32.xlu0 %v1327, 64
    %v1329 = vpop.permute.xlu0 %1328
    %1331 = vst.msk [vmem:[#allocation3 + $0xb] sm:$0x1] %vm1169, %v1329
    %1332 = vst.sshfl [vmem:[#allocation1] sm:$0xff pattern:$0x73625140] %v1168
    %s1333 = scalar_lea.vmem [#allocation1], 1
    %v1334 = vld [vmem:[%s1333] ss:$4 sm:$0xff]
    %v1335 = vrot.slane %v1334, 7
    %v1336 = vrot.slane %v1335, 2
    %1338 = vst.msk [vmem:[#allocation3 + $0xb] sm:$0x1] %vm1177, %v1336
    %1339 = vst.sshfl [vmem:[#allocation1] sm:$0xff pattern:$0x73625140] %v1168
    %s1340 = scalar_lea.vmem [#allocation1], 2
    %v1341 = vld [vmem:[%s1340] ss:$4 sm:$0xff]
    %1342 = vrot.lane.b32.xlu0 %v1341, 64
    %v1343 = vpop.permute.xlu0 %1342
    %1345 = vst.msk [vmem:[#allocation3 + $0xd] sm:$0x1] %vm1169, %v1343
    %1346 = vst.sshfl [vmem:[#allocation1] sm:$0xff pattern:$0x73625140] %v1168
    %s1347 = scalar_lea.vmem [#allocation1], 2
    %v1348 = vld [vmem:[%s1347] ss:$4 sm:$0xff]
    %v1349 = vrot.slane %v1348, 7
    %v1350 = vrot.slane %v1349, 2
    %1352 = vst.msk [vmem:[#allocation3 + $0xd] sm:$0x1] %vm1177, %v1350
    %1353 = vst.sshfl [vmem:[#allocation1] sm:$0xff pattern:$0x73625140] %v1168
    %s1354 = scalar_lea.vmem [#allocation1], 3
    %v1355 = vld [vmem:[%s1354] ss:$4 sm:$0xff]
    %1356 = vrot.lane.b32.xlu0 %v1355, 64
    %v1357 = vpop.permute.xlu0 %1356
    %1359 = vst.msk [vmem:[#allocation3 + $0xf] sm:$0x1] %vm1169, %v1357
    %1360 = vst.sshfl [vmem:[#allocation1] sm:$0xff pattern:$0x73625140] %v1168
    %s1361 = scalar_lea.vmem [#allocation1], 3
    %v1362 = vld [vmem:[%s1361] ss:$4 sm:$0xff]
    %v1363 = vrot.slane %v1362, 7
    %v1364 = vrot.slane %v1363, 2
    %1366 = vst.msk [vmem:[#allocation3 + $0xf] sm:$0x1] %vm1177, %v1364
    %v1367 = vld [vmem:[#allocation3] sm:$0xff]
    %v1368 = vld [vmem:[#allocation3 + $0x8] sm:$0xff]
    %v1369 = vld [vmem:[%s6] sm:$0xff]
    %v1370 = vld [vmem:[%s6 + $0x8] sm:$0xff]
    %v1371 = vld [vmem:[%s6 + $0x10] sm:$0xff]
    %v1372 = vld [vmem:[%s6 + $0x18] sm:$0xff]
    %v1373 = vld [vmem:[%s6 + $0x20] sm:$0xff]
    %v1374 = vld [vmem:[%s6 + $0x28] sm:$0xff]
    %v1375 = vld [vmem:[%s6 + $0x30] sm:$0xff]
    %v1376 = vld [vmem:[%s6 + $0x38] sm:$0xff]
    %v1377 = vld [vmem:[%s6 + $0x40] sm:$0xff]
    %v1378 = vld [vmem:[%s6 + $0x48] sm:$0xff]
    %v1379 = vld [vmem:[%s6 + $0x50] sm:$0xff]
    %v1380 = vld [vmem:[%s6 + $0x58] sm:$0xff]
    %v1381 = vld [vmem:[%s6 + $0x60] sm:$0xff]
    %v1382 = vld [vmem:[%s6 + $0x68] sm:$0xff]
    %v1383 = vld [vmem:[%s6 + $0x70] sm:$0xff]
    %v1384 = vld [vmem:[%s6 + $0x78] sm:$0xff]
    %v1385 = vld [vmem:[%s6 + $0x80] sm:$0xff]
    %v1386 = vld [vmem:[%s6 + $0x88] sm:$0xff]
    %v1387 = vld [vmem:[%s6 + $0x90] sm:$0xff]
    %v1388 = vld [vmem:[%s6 + $0x98] sm:$0xff]
    %v1389 = vld [vmem:[%s6 + $0xa0] sm:$0xff]
    %v1390 = vld [vmem:[%s6 + $0xa8] sm:$0xff]
    %v1391 = vld [vmem:[%s6 + $0xb0] sm:$0xff]
    %v1392 = vld [vmem:[%s6 + $0xb8] sm:$0xff]
    %v1393 = vld [vmem:[%s6 + $0xc0] sm:$0xff]
    %v1394 = vld [vmem:[%s6 + $0xc8] sm:$0xff]
    %v1395 = vld [vmem:[%s6 + $0xd0] sm:$0xff]
    %v1396 = vld [vmem:[%s6 + $0xd8] sm:$0xff]
    %v1397 = vld [vmem:[%s6 + $0xe0] sm:$0xff]
    %v1398 = vld [vmem:[%s6 + $0xe8] sm:$0xff]
    %v1399 = vld [vmem:[%s6 + $0xf0] sm:$0xff]
    %v1400 = vld [vmem:[%s6 + $0xf8] sm:$0xff]
    %v1401 = vld [vmem:[%s6 + $0x100] sm:$0xff]
    %v1402 = vld [vmem:[%s6 + $0x108] sm:$0xff]
    %v1403 = vld [vmem:[%s6 + $0x110] sm:$0xff]
    %v1404 = vld [vmem:[%s6 + $0x118] sm:$0xff]
    %v1405 = vld [vmem:[%s6 + $0x120] sm:$0xff]
    %v1406 = vld [vmem:[%s6 + $0x128] sm:$0xff]
    %v1407 = vld [vmem:[%s6 + $0x130] sm:$0xff]
    %v1408 = vld [vmem:[%s6 + $0x138] sm:$0xff]
    %v1409 = vld [vmem:[%s6 + $0x140] sm:$0xff]
    %v1410 = vld [vmem:[%s6 + $0x148] sm:$0xff]
    %v1411 = vld [vmem:[%s6 + $0x150] sm:$0xff]
    %v1412 = vld [vmem:[%s6 + $0x158] sm:$0xff]
    %v1413 = vld [vmem:[%s6 + $0x160] sm:$0xff]
    %v1414 = vld [vmem:[%s6 + $0x168] sm:$0xff]
    %v1415 = vld [vmem:[%s6 + $0x170] sm:$0xff]
    %v1416 = vld [vmem:[%s6 + $0x178] sm:$0xff]
    %v1417 = vld [vmem:[%s6 + $0x180] sm:$0xff]
    %v1418 = vld [vmem:[%s6 + $0x188] sm:$0xff]
    %v1419 = vld [vmem:[%s6 + $0x190] sm:$0xff]
    %v1420 = vld [vmem:[%s6 + $0x198] sm:$0xff]
    %v1421 = vld [vmem:[%s6 + $0x1a0] sm:$0xff]
    %v1422 = vld [vmem:[%s6 + $0x1a8] sm:$0xff]
    %v1423 = vld [vmem:[%s6 + $0x1b0] sm:$0xff]
    %v1424 = vld [vmem:[%s6 + $0x1b8] sm:$0xff]
    %v1425 = vld [vmem:[%s6 + $0x1c0] sm:$0xff]
    %v1426 = vld [vmem:[%s6 + $0x1c8] sm:$0xff]
    %v1427 = vld [vmem:[%s6 + $0x1d0] sm:$0xff]
    %v1428 = vld [vmem:[%s6 + $0x1d8] sm:$0xff]
    %v1429 = vld [vmem:[%s6 + $0x1e0] sm:$0xff]
    %v1430 = vld [vmem:[%s6 + $0x1e8] sm:$0xff]
    %v1431 = vld [vmem:[%s6 + $0x1f0] sm:$0xff]
    %v1432 = vld [vmem:[%s6 + $0x1f8] sm:$0xff]
    %v1433 = vld [vmem:[%s6 + $0x200] sm:$0xff]
    %v1434 = vld [vmem:[%s6 + $0x208] sm:$0xff]
    %v1435 = vld [vmem:[%s6 + $0x210] sm:$0xff]
    %v1436 = vld [vmem:[%s6 + $0x218] sm:$0xff]
    %v1437 = vld [vmem:[%s6 + $0x220] sm:$0xff]
    %v1438 = vld [vmem:[%s6 + $0x228] sm:$0xff]
    %v1439 = vld [vmem:[%s6 + $0x230] sm:$0xff]
    %v1440 = vld [vmem:[%s6 + $0x238] sm:$0xff]
    %v1441 = vld [vmem:[%s6 + $0x240] sm:$0xff]
    %v1442 = vld [vmem:[%s6 + $0x248] sm:$0xff]
    %v1443 = vld [vmem:[%s6 + $0x250] sm:$0xff]
    %v1444 = vld [vmem:[%s6 + $0x258] sm:$0xff]
    %v1445 = vld [vmem:[%s6 + $0x260] sm:$0xff]
    %v1446 = vld [vmem:[%s6 + $0x268] sm:$0xff]
    %v1447 = vld [vmem:[%s6 + $0x270] sm:$0xff]
    %v1448 = vld [vmem:[%s6 + $0x278] sm:$0xff]
    %v1449 = vld [vmem:[%s6 + $0x280] sm:$0xff]
    %v1450 = vld [vmem:[%s6 + $0x288] sm:$0xff]
    %v1451 = vld [vmem:[%s6 + $0x290] sm:$0xff]
    %v1452 = vld [vmem:[%s6 + $0x298] sm:$0xff]
    %v1453 = vld [vmem:[%s6 + $0x2a0] sm:$0xff]
    %v1454 = vld [vmem:[%s6 + $0x2a8] sm:$0xff]
    %v1455 = vld [vmem:[%s6 + $0x2b0] sm:$0xff]
    %v1456 = vld [vmem:[%s6 + $0x2b8] sm:$0xff]
    %v1457 = vld [vmem:[%s6 + $0x2c0] sm:$0xff]
    %v1458 = vld [vmem:[%s6 + $0x2c8] sm:$0xff]
    %v1459 = vld [vmem:[%s6 + $0x2d0] sm:$0xff]
    %v1460 = vld [vmem:[%s6 + $0x2d8] sm:$0xff]
    %v1461 = vld [vmem:[%s6 + $0x2e0] sm:$0xff]
    %v1462 = vld [vmem:[%s6 + $0x2e8] sm:$0xff]
    %v1463 = vld [vmem:[%s6 + $0x2f0] sm:$0xff]
    %v1464 = vld [vmem:[%s6 + $0x2f8] sm:$0xff]
    %v1465 = vld [vmem:[%s6 + $0x300] sm:$0xff]
    %v1466 = vld [vmem:[%s6 + $0x308] sm:$0xff]
    %v1467 = vld [vmem:[%s6 + $0x310] sm:$0xff]
    %v1468 = vld [vmem:[%s6 + $0x318] sm:$0xff]
    %v1469 = vld [vmem:[%s6 + $0x320] sm:$0xff]
    %v1470 = vld [vmem:[%s6 + $0x328] sm:$0xff]
    %v1471 = vld [vmem:[%s6 + $0x330] sm:$0xff]
    %v1472 = vld [vmem:[%s6 + $0x338] sm:$0xff]
    %v1473 = vld [vmem:[%s6 + $0x340] sm:$0xff]
    %v1474 = vld [vmem:[%s6 + $0x348] sm:$0xff]
    %v1475 = vld [vmem:[%s6 + $0x350] sm:$0xff]
    %v1476 = vld [vmem:[%s6 + $0x358] sm:$0xff]
    %v1477 = vld [vmem:[%s6 + $0x360] sm:$0xff]
    %v1478 = vld [vmem:[%s6 + $0x368] sm:$0xff]
    %v1479 = vld [vmem:[%s6 + $0x370] sm:$0xff]
    %v1480 = vld [vmem:[%s6 + $0x378] sm:$0xff]
    %v1481 = vld [vmem:[%s6 + $0x380] sm:$0xff]
    %v1482 = vld [vmem:[%s6 + $0x388] sm:$0xff]
    %v1483 = vld [vmem:[%s6 + $0x390] sm:$0xff]
    %v1484 = vld [vmem:[%s6 + $0x398] sm:$0xff]
    %v1485 = vld [vmem:[%s6 + $0x3a0] sm:$0xff]
    %v1486 = vld [vmem:[%s6 + $0x3a8] sm:$0xff]
    %v1487 = vld [vmem:[%s6 + $0x3b0] sm:$0xff]
    %v1488 = vld [vmem:[%s6 + $0x3b8] sm:$0xff]
    %v1489 = vld [vmem:[%s6 + $0x3c0] sm:$0xff]
    %v1490 = vld [vmem:[%s6 + $0x3c8] sm:$0xff]
    %v1491 = vld [vmem:[%s6 + $0x3d0] sm:$0xff]
    %v1492 = vld [vmem:[%s6 + $0x3d8] sm:$0xff]
    %v1493 = vld [vmem:[%s6 + $0x3e0] sm:$0xff]
    %v1494 = vld [vmem:[%s6 + $0x3e8] sm:$0xff]
    %v1495 = vld [vmem:[%s6 + $0x3f0] sm:$0xff]
    %v1496 = vld [vmem:[%s6 + $0x3f8] sm:$0xff]
    %v1497 = vld [vmem:[%s6 + $0x400] sm:$0xff]
    %v1498 = vld [vmem:[%s6 + $0x408] sm:$0xff]
    %v1499 = vld [vmem:[%s6 + $0x410] sm:$0xff]
    %v1500 = vld [vmem:[%s6 + $0x418] sm:$0xff]
    %v1501 = vld [vmem:[%s6 + $0x420] sm:$0xff]
    %v1502 = vld [vmem:[%s6 + $0x428] sm:$0xff]
    %v1503 = vld [vmem:[%s6 + $0x430] sm:$0xff]
    %v1504 = vld [vmem:[%s6 + $0x438] sm:$0xff]
    %v1505 = vld [vmem:[%s6 + $0x440] sm:$0xff]
    %v1506 = vld [vmem:[%s6 + $0x448] sm:$0xff]
    %v1507 = vld [vmem:[%s6 + $0x450] sm:$0xff]
    %v1508 = vld [vmem:[%s6 + $0x458] sm:$0xff]
    %v1509 = vld [vmem:[%s6 + $0x460] sm:$0xff]
    %v1510 = vld [vmem:[%s6 + $0x468] sm:$0xff]
    %v1511 = vld [vmem:[%s6 + $0x470] sm:$0xff]
    %v1512 = vld [vmem:[%s6 + $0x478] sm:$0xff]
    %v1513 = vld [vmem:[%s6 + $0x480] sm:$0xff]
    %v1514 = vld [vmem:[%s6 + $0x488] sm:$0xff]
    %v1515 = vld [vmem:[%s6 + $0x490] sm:$0xff]
    %v1516 = vld [vmem:[%s6 + $0x498] sm:$0xff]
    %v1517 = vld [vmem:[%s6 + $0x4a0] sm:$0xff]
    %v1518 = vld [vmem:[%s6 + $0x4a8] sm:$0xff]
    %v1519 = vld [vmem:[%s6 + $0x4b0] sm:$0xff]
    %v1520 = vld [vmem:[%s6 + $0x4b8] sm:$0xff]
    %v1521 = vld [vmem:[%s6 + $0x4c0] sm:$0xff]
    %v1522 = vld [vmem:[%s6 + $0x4c8] sm:$0xff]
    %v1523 = vld [vmem:[%s6 + $0x4d0] sm:$0xff]
    %v1524 = vld [vmem:[%s6 + $0x4d8] sm:$0xff]
    %v1525 = vld [vmem:[%s6 + $0x4e0] sm:$0xff]
    %v1526 = vld [vmem:[%s6 + $0x4e8] sm:$0xff]
    %v1527 = vld [vmem:[%s6 + $0x4f0] sm:$0xff]
    %v1528 = vld [vmem:[%s6 + $0x4f8] sm:$0xff]
    %v1529 = vld [vmem:[%s6 + $0x500] sm:$0xff]
    %v1530 = vld [vmem:[%s6 + $0x508] sm:$0xff]
    %v1531 = vld [vmem:[%s6 + $0x510] sm:$0xff]
    %v1532 = vld [vmem:[%s6 + $0x518] sm:$0xff]
    %v1533 = vld [vmem:[%s6 + $0x520] sm:$0xff]
    %v1534 = vld [vmem:[%s6 + $0x528] sm:$0xff]
    %v1535 = vld [vmem:[%s6 + $0x530] sm:$0xff]
    %v1536 = vld [vmem:[%s6 + $0x538] sm:$0xff]
    %v1537 = vld [vmem:[%s6 + $0x540] sm:$0xff]
    %v1538 = vld [vmem:[%s6 + $0x548] sm:$0xff]
    %v1539 = vld [vmem:[%s6 + $0x550] sm:$0xff]
    %v1540 = vld [vmem:[%s6 + $0x558] sm:$0xff]
    %v1541 = vld [vmem:[%s6 + $0x560] sm:$0xff]
    %v1542 = vld [vmem:[%s6 + $0x568] sm:$0xff]
    %v1543 = vld [vmem:[%s6 + $0x570] sm:$0xff]
    %v1544 = vld [vmem:[%s6 + $0x578] sm:$0xff]
    %v1545 = vld [vmem:[%s6 + $0x580] sm:$0xff]
    %v1546 = vld [vmem:[%s6 + $0x588] sm:$0xff]
    %v1547 = vld [vmem:[%s6 + $0x590] sm:$0xff]
    %v1548 = vld [vmem:[%s6 + $0x598] sm:$0xff]
    %v1549 = vld [vmem:[%s6 + $0x5a0] sm:$0xff]
    %v1550 = vld [vmem:[%s6 + $0x5a8] sm:$0xff]
    %v1551 = vld [vmem:[%s6 + $0x5b0] sm:$0xff]
    %v1552 = vld [vmem:[%s6 + $0x5b8] sm:$0xff]
    %v1553 = vld [vmem:[%s6 + $0x5c0] sm:$0xff]
    %v1554 = vld [vmem:[%s6 + $0x5c8] sm:$0xff]
    %v1555 = vld [vmem:[%s6 + $0x5d0] sm:$0xff]
    %v1556 = vld [vmem:[%s6 + $0x5d8] sm:$0xff]
    %v1557 = vld [vmem:[%s6 + $0x5e0] sm:$0xff]
    %v1558 = vld [vmem:[%s6 + $0x5e8] sm:$0xff]
    %v1559 = vld [vmem:[%s6 + $0x5f0] sm:$0xff]
    %v1560 = vld [vmem:[%s6 + $0x5f8] sm:$0xff]
    %v1561 = vld [vmem:[%s6 + $0x600] sm:$0xff]
    %v1562 = vld [vmem:[%s6 + $0x608] sm:$0xff]
    %v1563 = vld [vmem:[%s6 + $0x610] sm:$0xff]
    %v1564 = vld [vmem:[%s6 + $0x618] sm:$0xff]
    %v1565 = vld [vmem:[%s6 + $0x620] sm:$0xff]
    %v1566 = vld [vmem:[%s6 + $0x628] sm:$0xff]
    %v1567 = vld [vmem:[%s6 + $0x630] sm:$0xff]
    %v1568 = vld [vmem:[%s6 + $0x638] sm:$0xff]
    %v1569 = vld [vmem:[%s6 + $0x640] sm:$0xff]
    %v1570 = vld [vmem:[%s6 + $0x648] sm:$0xff]
    %v1571 = vld [vmem:[%s6 + $0x650] sm:$0xff]
    %v1572 = vld [vmem:[%s6 + $0x658] sm:$0xff]
    %v1573 = vld [vmem:[%s6 + $0x660] sm:$0xff]
    %v1574 = vld [vmem:[%s6 + $0x668] sm:$0xff]
    %v1575 = vld [vmem:[%s6 + $0x670] sm:$0xff]
    %v1576 = vld [vmem:[%s6 + $0x678] sm:$0xff]
    %v1577 = vld [vmem:[%s6 + $0x680] sm:$0xff]
    %v1578 = vld [vmem:[%s6 + $0x688] sm:$0xff]
    %v1579 = vld [vmem:[%s6 + $0x690] sm:$0xff]
    %v1580 = vld [vmem:[%s6 + $0x698] sm:$0xff]
    %v1581 = vld [vmem:[%s6 + $0x6a0] sm:$0xff]
    %v1582 = vld [vmem:[%s6 + $0x6a8] sm:$0xff]
    %v1583 = vld [vmem:[%s6 + $0x6b0] sm:$0xff]
    %v1584 = vld [vmem:[%s6 + $0x6b8] sm:$0xff]
    %v1585 = vld [vmem:[%s6 + $0x6c0] sm:$0xff]
    %v1586 = vld [vmem:[%s6 + $0x6c8] sm:$0xff]
    %v1587 = vld [vmem:[%s6 + $0x6d0] sm:$0xff]
    %v1588 = vld [vmem:[%s6 + $0x6d8] sm:$0xff]
    %v1589 = vld [vmem:[%s6 + $0x6e0] sm:$0xff]
    %v1590 = vld [vmem:[%s6 + $0x6e8] sm:$0xff]
    %v1591 = vld [vmem:[%s6 + $0x6f0] sm:$0xff]
    %v1592 = vld [vmem:[%s6 + $0x6f8] sm:$0xff]
    %v1593 = vld [vmem:[%s6 + $0x700] sm:$0xff]
    %v1594 = vld [vmem:[%s6 + $0x708] sm:$0xff]
    %v1595 = vld [vmem:[%s6 + $0x710] sm:$0xff]
    %v1596 = vld [vmem:[%s6 + $0x718] sm:$0xff]
    %v1597 = vld [vmem:[%s6 + $0x720] sm:$0xff]
    %v1598 = vld [vmem:[%s6 + $0x728] sm:$0xff]
    %v1599 = vld [vmem:[%s6 + $0x730] sm:$0xff]
    %v1600 = vld [vmem:[%s6 + $0x738] sm:$0xff]
    %v1601 = vld [vmem:[%s6 + $0x740] sm:$0xff]
    %v1602 = vld [vmem:[%s6 + $0x748] sm:$0xff]
    %v1603 = vld [vmem:[%s6 + $0x750] sm:$0xff]
    %v1604 = vld [vmem:[%s6 + $0x758] sm:$0xff]
    %v1605 = vld [vmem:[%s6 + $0x760] sm:$0xff]
    %v1606 = vld [vmem:[%s6 + $0x768] sm:$0xff]
    %v1607 = vld [vmem:[%s6 + $0x770] sm:$0xff]
    %v1608 = vld [vmem:[%s6 + $0x778] sm:$0xff]
    %v1609 = vld [vmem:[%s6 + $0x780] sm:$0xff]
    %v1610 = vld [vmem:[%s6 + $0x788] sm:$0xff]
    %v1611 = vld [vmem:[%s6 + $0x790] sm:$0xff]
    %v1612 = vld [vmem:[%s6 + $0x798] sm:$0xff]
    %v1613 = vld [vmem:[%s6 + $0x7a0] sm:$0xff]
    %v1614 = vld [vmem:[%s6 + $0x7a8] sm:$0xff]
    %v1615 = vld [vmem:[%s6 + $0x7b0] sm:$0xff]
    %v1616 = vld [vmem:[%s6 + $0x7b8] sm:$0xff]
    %v1617 = vld [vmem:[%s6 + $0x7c0] sm:$0xff]
    %v1618 = vld [vmem:[%s6 + $0x7c8] sm:$0xff]
    %v1619 = vld [vmem:[%s6 + $0x7d0] sm:$0xff]
    %v1620 = vld [vmem:[%s6 + $0x7d8] sm:$0xff]
    %v1621 = vld [vmem:[%s6 + $0x7e0] sm:$0xff]
    %v1622 = vld [vmem:[%s6 + $0x7e8] sm:$0xff]
    %v1623 = vld [vmem:[%s6 + $0x7f0] sm:$0xff]
    %v1624 = vld [vmem:[%s6 + $0x7f8] sm:$0xff]
    %v1625 = vld [vmem:[%s7] sm:$0x3]
    %v1627 = vperm.slane %v1625, 0
    %v1628 = vperm.slane %v1625, 1
    %1633 = vst [vmem:[#allocation1] ss:$4 sm:$0xff] %v1367
    %s1634 = scalar_lea.vmem [#allocation1], 32
    %1635 = vst [vmem:[%s1634] ss:$4 sm:$0xff] %v1368
    %v1636 = vld.sshfl [vmem:[#allocation1] sm:$0xff pattern:$0x73625140]
    %v1637 = vld.sshfl [vmem:[#allocation1 + $0x8] sm:$0xff pattern:$0x73625140]
    %v1638 = vld.sshfl [vmem:[#allocation1 + $0x10] sm:$0xff pattern:$0x73625140]
    %v1639 = vld.sshfl [vmem:[#allocation1 + $0x18] sm:$0xff pattern:$0x73625140]
    %v1640 = vld.sshfl [vmem:[#allocation1 + $0x20] sm:$0xff pattern:$0x73625140]
    %v1641 = vld.sshfl [vmem:[#allocation1 + $0x28] sm:$0xff pattern:$0x73625140]
    %v1642 = vld.sshfl [vmem:[#allocation1 + $0x30] sm:$0xff pattern:$0x73625140]
    %v1643 = vld.sshfl [vmem:[#allocation1 + $0x38] sm:$0xff pattern:$0x73625140]
    %1652 = vmatpush.msra.mxu0 %v1399
    %1653 = vmatpush.msra.mxu0 %v1397
    %1654 = vmatpush.msra.mxu0 %v1395
    %1655 = vmatpush.msra.mxu0 %v1393
    %1656 = vmatpush.msra.mxu0 %v1391
    %1657 = vmatpush.msra.mxu0 %v1389
    %1658 = vmatpush.msra.mxu0 %v1387
    %1659 = vmatpush.msra.mxu0 %v1385
    %1660 = vmatpush.msra.mxu0 %v1383
    %1661 = vmatpush.msra.mxu0 %v1381
    %1662 = vmatpush.msra.mxu0 %v1379
    %1663 = vmatpush.msra.mxu0 %v1377
    %1664 = vmatpush.msra.mxu0 %v1375
    %1665 = vmatpush.msra.mxu0 %v1373
    %1666 = vmatpush.msra.mxu0 %v1371
    %1667 = vmatpush.msra.mxu0 %v1369
    %1668 = vmatmul.f32.gmra.mxu0 %v1636
    %v1669 = vpop.f32.mrf.mxu0
    %v1670 = vadd.f32 %v1627, %v1669
    %1671 = vdwg.mxu0
    %1672 = vmatpush.msra.mxu0 %v1431
    %1673 = vmatpush.msra.mxu0 %v1429
    %1674 = vmatpush.msra.mxu0 %v1427
    %1675 = vmatpush.msra.mxu0 %v1425
    %1676 = vmatpush.msra.mxu0 %v1423
    %1677 = vmatpush.msra.mxu0 %v1421
    %1678 = vmatpush.msra.mxu0 %v1419
    %1679 = vmatpush.msra.mxu0 %v1417
    %1680 = vmatpush.msra.mxu0 %v1415
    %1681 = vmatpush.msra.mxu0 %v1413
    %1682 = vmatpush.msra.mxu0 %v1411
    %1683 = vmatpush.msra.mxu0 %v1409
    %1684 = vmatpush.msra.mxu0 %v1407
    %1685 = vmatpush.msra.mxu0 %v1405
    %1686 = vmatpush.msra.mxu0 %v1403
    %1687 = vmatpush.msra.mxu0 %v1401
    %1688 = vmatmul.f32.gmra.mxu0 %v1637
    %v1689 = vpop.f32.mrf.mxu0
    %v1690 = vadd.f32 %v1670, %v1689
    %1691 = vdwg.mxu0
    %1692 = vmatpush.msra.mxu0 %v1463
    %1693 = vmatpush.msra.mxu0 %v1461
    %1694 = vmatpush.msra.mxu0 %v1459
    %1695 = vmatpush.msra.mxu0 %v1457
    %1696 = vmatpush.msra.mxu0 %v1455
    %1697 = vmatpush.msra.mxu0 %v1453
    %1698 = vmatpush.msra.mxu0 %v1451
    %1699 = vmatpush.msra.mxu0 %v1449
    %1700 = vmatpush.msra.mxu0 %v1447
    %1701 = vmatpush.msra.mxu0 %v1445
    %1702 = vmatpush.msra.mxu0 %v1443
    %1703 = vmatpush.msra.mxu0 %v1441
    %1704 = vmatpush.msra.mxu0 %v1439
    %1705 = vmatpush.msra.mxu0 %v1437
    %1706 = vmatpush.msra.mxu0 %v1435
    %1707 = vmatpush.msra.mxu0 %v1433
    %1708 = vmatmul.f32.gmra.mxu0 %v1638
    %v1709 = vpop.f32.mrf.mxu0
    %v1710 = vadd.f32 %v1690, %v1709
    %1711 = vdwg.mxu0
    %1712 = vmatpush.msra.mxu0 %v1495
    %1713 = vmatpush.msra.mxu0 %v1493
    %1714 = vmatpush.msra.mxu0 %v1491
    %1715 = vmatpush.msra.mxu0 %v1489
    %1716 = vmatpush.msra.mxu0 %v1487
    %1717 = vmatpush.msra.mxu0 %v1485
    %1718 = vmatpush.msra.mxu0 %v1483
    %1719 = vmatpush.msra.mxu0 %v1481
    %1720 = vmatpush.msra.mxu0 %v1479
    %1721 = vmatpush.msra.mxu0 %v1477
    %1722 = vmatpush.msra.mxu0 %v1475
    %1723 = vmatpush.msra.mxu0 %v1473
    %1724 = vmatpush.msra.mxu0 %v1471
    %1725 = vmatpush.msra.mxu0 %v1469
    %1726 = vmatpush.msra.mxu0 %v1467
    %1727 = vmatpush.msra.mxu0 %v1465
    %1728 = vmatmul.f32.gmra.mxu0 %v1639
    %v1729 = vpop.f32.mrf.mxu0
    %v1730 = vadd.f32 %v1710, %v1729
    %1731 = vdwg.mxu0
    %1732 = vmatpush.msra.mxu0 %v1527
    %1733 = vmatpush.msra.mxu0 %v1525
    %1734 = vmatpush.msra.mxu0 %v1523
    %1735 = vmatpush.msra.mxu0 %v1521
    %1736 = vmatpush.msra.mxu0 %v1519
    %1737 = vmatpush.msra.mxu0 %v1517
    %1738 = vmatpush.msra.mxu0 %v1515
    %1739 = vmatpush.msra.mxu0 %v1513
    %1740 = vmatpush.msra.mxu0 %v1511
    %1741 = vmatpush.msra.mxu0 %v1509
    %1742 = vmatpush.msra.mxu0 %v1507
    %1743 = vmatpush.msra.mxu0 %v1505
    %1744 = vmatpush.msra.mxu0 %v1503
    %1745 = vmatpush.msra.mxu0 %v1501
    %1746 = vmatpush.msra.mxu0 %v1499
    %1747 = vmatpush.msra.mxu0 %v1497
    %1748 = vmatmul.f32.gmra.mxu0 %v1640
    %v1749 = vpop.f32.mrf.mxu0
    %v1750 = vadd.f32 %v1730, %v1749
    %1751 = vdwg.mxu0
    %1752 = vmatpush.msra.mxu0 %v1559
    %1753 = vmatpush.msra.mxu0 %v1557
    %1754 = vmatpush.msra.mxu0 %v1555
    %1755 = vmatpush.msra.mxu0 %v1553
    %1756 = vmatpush.msra.mxu0 %v1551
    %1757 = vmatpush.msra.mxu0 %v1549
    %1758 = vmatpush.msra.mxu0 %v1547
    %1759 = vmatpush.msra.mxu0 %v1545
    %1760 = vmatpush.msra.mxu0 %v1543
    %1761 = vmatpush.msra.mxu0 %v1541
    %1762 = vmatpush.msra.mxu0 %v1539
    %1763 = vmatpush.msra.mxu0 %v1537
    %1764 = vmatpush.msra.mxu0 %v1535
    %1765 = vmatpush.msra.mxu0 %v1533
    %1766 = vmatpush.msra.mxu0 %v1531
    %1767 = vmatpush.msra.mxu0 %v1529
    %1768 = vmatmul.f32.gmra.mxu0 %v1641
    %v1769 = vpop.f32.mrf.mxu0
    %v1770 = vadd.f32 %v1750, %v1769
    %1771 = vdwg.mxu0
    %1772 = vmatpush.msra.mxu0 %v1591
    %1773 = vmatpush.msra.mxu0 %v1589
    %1774 = vmatpush.msra.mxu0 %v1587
    %1775 = vmatpush.msra.mxu0 %v1585
    %1776 = vmatpush.msra.mxu0 %v1583
    %1777 = vmatpush.msra.mxu0 %v1581
    %1778 = vmatpush.msra.mxu0 %v1579
    %1779 = vmatpush.msra.mxu0 %v1577
    %1780 = vmatpush.msra.mxu0 %v1575
    %1781 = vmatpush.msra.mxu0 %v1573
    %1782 = vmatpush.msra.mxu0 %v1571
    %1783 = vmatpush.msra.mxu0 %v1569
    %1784 = vmatpush.msra.mxu0 %v1567
    %1785 = vmatpush.msra.mxu0 %v1565
    %1786 = vmatpush.msra.mxu0 %v1563
    %1787 = vmatpush.msra.mxu0 %v1561
    %1788 = vmatmul.f32.gmra.mxu0 %v1642
    %v1789 = vpop.f32.mrf.mxu0
    %v1790 = vadd.f32 %v1770, %v1789
    %1791 = vdwg.mxu0
    %1792 = vmatpush.msra.mxu0 %v1623
    %1793 = vmatpush.msra.mxu0 %v1621
    %1794 = vmatpush.msra.mxu0 %v1619
    %1795 = vmatpush.msra.mxu0 %v1617
    %1796 = vmatpush.msra.mxu0 %v1615
    %1797 = vmatpush.msra.mxu0 %v1613
    %1798 = vmatpush.msra.mxu0 %v1611
    %1799 = vmatpush.msra.mxu0 %v1609
    %1800 = vmatpush.msra.mxu0 %v1607
    %1801 = vmatpush.msra.mxu0 %v1605
    %1802 = vmatpush.msra.mxu0 %v1603
    %1803 = vmatpush.msra.mxu0 %v1601
    %1804 = vmatpush.msra.mxu0 %v1599
    %1805 = vmatpush.msra.mxu0 %v1597
    %1806 = vmatpush.msra.mxu0 %v1595
    %1807 = vmatpush.msra.mxu0 %v1593
    %1808 = vmatmul.f32.gmra.mxu0 %v1643
    %v1809 = vpop.f32.mrf.mxu0
    %v1810 = vadd.f32 %v1790, %v1809
    %1811 = vdwg.mxu0
    %1812 = vmatpush.msra.mxu0 %v1400
    %1813 = vmatpush.msra.mxu0 %v1398
    %1814 = vmatpush.msra.mxu0 %v1396
    %1815 = vmatpush.msra.mxu0 %v1394
    %1816 = vmatpush.msra.mxu0 %v1392
    %1817 = vmatpush.msra.mxu0 %v1390
    %1818 = vmatpush.msra.mxu0 %v1388
    %1819 = vmatpush.msra.mxu0 %v1386
    %1820 = vmatpush.msra.mxu0 %v1384
    %1821 = vmatpush.msra.mxu0 %v1382
    %1822 = vmatpush.msra.mxu0 %v1380
    %1823 = vmatpush.msra.mxu0 %v1378
    %1824 = vmatpush.msra.mxu0 %v1376
    %1825 = vmatpush.msra.mxu0 %v1374
    %1826 = vmatpush.msra.mxu0 %v1372
    %1827 = vmatpush.msra.mxu0 %v1370
    %1828 = vmatmul.f32.gmra.mxu0 %v1636
    %v1829 = vpop.f32.mrf.mxu0
    %v1830 = vadd.f32 %v1628, %v1829
    %1831 = vdwg.mxu0
    %1832 = vmatpush.msra.mxu0 %v1432
    %1833 = vmatpush.msra.mxu0 %v1430
    %1834 = vmatpush.msra.mxu0 %v1428
    %1835 = vmatpush.msra.mxu0 %v1426
    %1836 = vmatpush.msra.mxu0 %v1424
    %1837 = vmatpush.msra.mxu0 %v1422
    %1838 = vmatpush.msra.mxu0 %v1420
    %1839 = vmatpush.msra.mxu0 %v1418
    %1840 = vmatpush.msra.mxu0 %v1416
    %1841 = vmatpush.msra.mxu0 %v1414
    %1842 = vmatpush.msra.mxu0 %v1412
    %1843 = vmatpush.msra.mxu0 %v1410
    %1844 = vmatpush.msra.mxu0 %v1408
    %1845 = vmatpush.msra.mxu0 %v1406
    %1846 = vmatpush.msra.mxu0 %v1404
    %1847 = vmatpush.msra.mxu0 %v1402
    %1848 = vmatmul.f32.gmra.mxu0 %v1637
    %v1849 = vpop.f32.mrf.mxu0
    %v1850 = vadd.f32 %v1830, %v1849
    %1851 = vdwg.mxu0
    %1852 = vmatpush.msra.mxu0 %v1464
    %1853 = vmatpush.msra.mxu0 %v1462
    %1854 = vmatpush.msra.mxu0 %v1460
    %1855 = vmatpush.msra.mxu0 %v1458
    %1856 = vmatpush.msra.mxu0 %v1456
    %1857 = vmatpush.msra.mxu0 %v1454
    %1858 = vmatpush.msra.mxu0 %v1452
    %1859 = vmatpush.msra.mxu0 %v1450
    %1860 = vmatpush.msra.mxu0 %v1448
    %1861 = vmatpush.msra.mxu0 %v1446
    %1862 = vmatpush.msra.mxu0 %v1444
    %1863 = vmatpush.msra.mxu0 %v1442
    %1864 = vmatpush.msra.mxu0 %v1440
    %1865 = vmatpush.msra.mxu0 %v1438
    %1866 = vmatpush.msra.mxu0 %v1436
    %1867 = vmatpush.msra.mxu0 %v1434
    %1868 = vmatmul.f32.gmra.mxu0 %v1638
    %v1869 = vpop.f32.mrf.mxu0
    %v1870 = vadd.f32 %v1850, %v1869
    %1871 = vdwg.mxu0
    %1872 = vmatpush.msra.mxu0 %v1496
    %1873 = vmatpush.msra.mxu0 %v1494
    %1874 = vmatpush.msra.mxu0 %v1492
    %1875 = vmatpush.msra.mxu0 %v1490
    %1876 = vmatpush.msra.mxu0 %v1488
    %1877 = vmatpush.msra.mxu0 %v1486
    %1878 = vmatpush.msra.mxu0 %v1484
    %1879 = vmatpush.msra.mxu0 %v1482
    %1880 = vmatpush.msra.mxu0 %v1480
    %1881 = vmatpush.msra.mxu0 %v1478
    %1882 = vmatpush.msra.mxu0 %v1476
    %1883 = vmatpush.msra.mxu0 %v1474
    %1884 = vmatpush.msra.mxu0 %v1472
    %1885 = vmatpush.msra.mxu0 %v1470
    %1886 = vmatpush.msra.mxu0 %v1468
    %1887 = vmatpush.msra.mxu0 %v1466
    %1888 = vmatmul.f32.gmra.mxu0 %v1639
    %v1889 = vpop.f32.mrf.mxu0
    %v1890 = vadd.f32 %v1870, %v1889
    %1891 = vdwg.mxu0
    %1892 = vmatpush.msra.mxu0 %v1528
    %1893 = vmatpush.msra.mxu0 %v1526
    %1894 = vmatpush.msra.mxu0 %v1524
    %1895 = vmatpush.msra.mxu0 %v1522
    %1896 = vmatpush.msra.mxu0 %v1520
    %1897 = vmatpush.msra.mxu0 %v1518
    %1898 = vmatpush.msra.mxu0 %v1516
    %1899 = vmatpush.msra.mxu0 %v1514
    %1900 = vmatpush.msra.mxu0 %v1512
    %1901 = vmatpush.msra.mxu0 %v1510
    %1902 = vmatpush.msra.mxu0 %v1508
    %1903 = vmatpush.msra.mxu0 %v1506
    %1904 = vmatpush.msra.mxu0 %v1504
    %1905 = vmatpush.msra.mxu0 %v1502
    %1906 = vmatpush.msra.mxu0 %v1500
    %1907 = vmatpush.msra.mxu0 %v1498
    %1908 = vmatmul.f32.gmra.mxu0 %v1640
    %v1909 = vpop.f32.mrf.mxu0
    %v1910 = vadd.f32 %v1890, %v1909
    %1911 = vdwg.mxu0
    %1912 = vmatpush.msra.mxu0 %v1560
    %1913 = vmatpush.msra.mxu0 %v1558
    %1914 = vmatpush.msra.mxu0 %v1556
    %1915 = vmatpush.msra.mxu0 %v1554
    %1916 = vmatpush.msra.mxu0 %v1552
    %1917 = vmatpush.msra.mxu0 %v1550
    %1918 = vmatpush.msra.mxu0 %v1548
    %1919 = vmatpush.msra.mxu0 %v1546
    %1920 = vmatpush.msra.mxu0 %v1544
    %1921 = vmatpush.msra.mxu0 %v1542
    %1922 = vmatpush.msra.mxu0 %v1540
    %1923 = vmatpush.msra.mxu0 %v1538
    %1924 = vmatpush.msra.mxu0 %v1536
    %1925 = vmatpush.msra.mxu0 %v1534
    %1926 = vmatpush.msra.mxu0 %v1532
    %1927 = vmatpush.msra.mxu0 %v1530
    %1928 = vmatmul.f32.gmra.mxu0 %v1641
    %v1929 = vpop.f32.mrf.mxu0
    %v1930 = vadd.f32 %v1910, %v1929
    %1931 = vdwg.mxu0
    %1932 = vmatpush.msra.mxu0 %v1592
    %1933 = vmatpush.msra.mxu0 %v1590
    %1934 = vmatpush.msra.mxu0 %v1588
    %1935 = vmatpush.msra.mxu0 %v1586
    %1936 = vmatpush.msra.mxu0 %v1584
    %1937 = vmatpush.msra.mxu0 %v1582
    %1938 = vmatpush.msra.mxu0 %v1580
    %1939 = vmatpush.msra.mxu0 %v1578
    %1940 = vmatpush.msra.mxu0 %v1576
    %1941 = vmatpush.msra.mxu0 %v1574
    %1942 = vmatpush.msra.mxu0 %v1572
    %1943 = vmatpush.msra.mxu0 %v1570
    %1944 = vmatpush.msra.mxu0 %v1568
    %1945 = vmatpush.msra.mxu0 %v1566
    %1946 = vmatpush.msra.mxu0 %v1564
    %1947 = vmatpush.msra.mxu0 %v1562
    %1948 = vmatmul.f32.gmra.mxu0 %v1642
    %v1949 = vpop.f32.mrf.mxu0
    %v1950 = vadd.f32 %v1930, %v1949
    %1951 = vdwg.mxu0
    %1952 = vmatpush.msra.mxu0 %v1624
    %1953 = vmatpush.msra.mxu0 %v1622
    %1954 = vmatpush.msra.mxu0 %v1620
    %1955 = vmatpush.msra.mxu0 %v1618
    %1956 = vmatpush.msra.mxu0 %v1616
    %1957 = vmatpush.msra.mxu0 %v1614
    %1958 = vmatpush.msra.mxu0 %v1612
    %1959 = vmatpush.msra.mxu0 %v1610
    %1960 = vmatpush.msra.mxu0 %v1608
    %1961 = vmatpush.msra.mxu0 %v1606
    %1962 = vmatpush.msra.mxu0 %v1604
    %1963 = vmatpush.msra.mxu0 %v1602
    %1964 = vmatpush.msra.mxu0 %v1600
    %1965 = vmatpush.msra.mxu0 %v1598
    %1966 = vmatpush.msra.mxu0 %v1596
    %1967 = vmatpush.msra.mxu0 %v1594
    %1968 = vmatmul.f32.gmra.mxu0 %v1643
    %v1969 = vpop.f32.mrf.mxu0
    %v1970 = vadd.f32 %v1950, %v1969
    %1971 = vdwg.mxu0
    %v1972 = vmax.f32 %v1810, 0.0
    %v1973 = vmax.f32 %v1970, 0.0
    %v1974 = vld [vmem:[%s8] sm:$0xff]
    %v1975 = vld [vmem:[%s8 + $0x8] sm:$0xff]
    %v1976 = vld [vmem:[%s8 + $0x10] sm:$0xff]
    %v1977 = vld [vmem:[%s8 + $0x18] sm:$0xff]
    %v1978 = vld [vmem:[%s8 + $0x20] sm:$0xff]
    %v1979 = vld [vmem:[%s8 + $0x28] sm:$0xff]
    %v1980 = vld [vmem:[%s8 + $0x30] sm:$0xff]
    %v1981 = vld [vmem:[%s8 + $0x38] sm:$0xff]
    %v1982 = vld [vmem:[%s8 + $0x40] sm:$0xff]
    %v1983 = vld [vmem:[%s8 + $0x48] sm:$0xff]
    %v1984 = vld [vmem:[%s8 + $0x50] sm:$0xff]
    %v1985 = vld [vmem:[%s8 + $0x58] sm:$0xff]
    %v1986 = vld [vmem:[%s8 + $0x60] sm:$0xff]
    %v1987 = vld [vmem:[%s8 + $0x68] sm:$0xff]
    %v1988 = vld [vmem:[%s8 + $0x70] sm:$0xff]
    %v1989 = vld [vmem:[%s8 + $0x78] sm:$0xff]
    %v1990 = vld [vmem:[%s8 + $0x80] sm:$0xff]
    %v1991 = vld [vmem:[%s8 + $0x88] sm:$0xff]
    %v1992 = vld [vmem:[%s8 + $0x90] sm:$0xff]
    %v1993 = vld [vmem:[%s8 + $0x98] sm:$0xff]
    %v1994 = vld [vmem:[%s8 + $0xa0] sm:$0xff]
    %v1995 = vld [vmem:[%s8 + $0xa8] sm:$0xff]
    %v1996 = vld [vmem:[%s8 + $0xb0] sm:$0xff]
    %v1997 = vld [vmem:[%s8 + $0xb8] sm:$0xff]
    %v1998 = vld [vmem:[%s8 + $0xc0] sm:$0xff]
    %v1999 = vld [vmem:[%s8 + $0xc8] sm:$0xff]
    %v2000 = vld [vmem:[%s8 + $0xd0] sm:$0xff]
    %v2001 = vld [vmem:[%s8 + $0xd8] sm:$0xff]
    %v2002 = vld [vmem:[%s8 + $0xe0] sm:$0xff]
    %v2003 = vld [vmem:[%s8 + $0xe8] sm:$0xff]
    %v2004 = vld [vmem:[%s8 + $0xf0] sm:$0xff]
    %v2005 = vld [vmem:[%s8 + $0xf8] sm:$0xff]
    %v2006 = vld [vmem:[%s9] sm:$0x1]
    %v2008 = vperm.slane %v2006, 0
    %2010 = vmatpush.msra.mxu0 %v1989
    %2011 = vmatpush.msra.mxu0 %v1988
    %2012 = vmatpush.msra.mxu0 %v1987
    %2013 = vmatpush.msra.mxu0 %v1986
    %2014 = vmatpush.msra.mxu0 %v1985
    %2015 = vmatpush.msra.mxu0 %v1984
    %2016 = vmatpush.msra.mxu0 %v1983
    %2017 = vmatpush.msra.mxu0 %v1982
    %2018 = vmatpush.msra.mxu0 %v1981
    %2019 = vmatpush.msra.mxu0 %v1980
    %2020 = vmatpush.msra.mxu0 %v1979
    %2021 = vmatpush.msra.mxu0 %v1978
    %2022 = vmatpush.msra.mxu0 %v1977
    %2023 = vmatpush.msra.mxu0 %v1976
    %2024 = vmatpush.msra.mxu0 %v1975
    %2025 = vmatpush.msra.mxu0 %v1974
    %2026 = vmatmul.f32.gmra.mxu0 %v1972
    %v2027 = vpop.f32.mrf.mxu0
    %v2028 = vadd.f32 %v2008, %v2027
    %2029 = vdwg.mxu0
    %2030 = vmatpush.msra.mxu0 %v2005
    %2031 = vmatpush.msra.mxu0 %v2004
    %2032 = vmatpush.msra.mxu0 %v2003
    %2033 = vmatpush.msra.mxu0 %v2002
    %2034 = vmatpush.msra.mxu0 %v2001
    %2035 = vmatpush.msra.mxu0 %v2000
    %2036 = vmatpush.msra.mxu0 %v1999
    %2037 = vmatpush.msra.mxu0 %v1998
    %2038 = vmatpush.msra.mxu0 %v1997
    %2039 = vmatpush.msra.mxu0 %v1996
    %2040 = vmatpush.msra.mxu0 %v1995
    %2041 = vmatpush.msra.mxu0 %v1994
    %2042 = vmatpush.msra.mxu0 %v1993
    %2043 = vmatpush.msra.mxu0 %v1992
    %2044 = vmatpush.msra.mxu0 %v1991
    %2045 = vmatpush.msra.mxu0 %v1990
    %2046 = vmatmul.f32.gmra.mxu0 %v1973
    %v2047 = vpop.f32.mrf.mxu0
    %v2048 = vadd.f32 %v2028, %v2047
    %2049 = vdwg.mxu0
    %vm2050 = vcmask 41984
    %2051 = vst.msk [vmem:[#allocation4] sm:$0x3] %vm2050, %v2048
    // Predicated region
    $region42: #{cnn_forward.1} parent=1 // pred_check
      _
    $region43: #{cnn_forward.1} parent=1 // pred_check_branch
      %2053 = sbr.rel (0) target = $region45
    $region44: #{cnn_forward.1} parent=1 // pred_region
      %2055 = vsyncadd [#allocation5], 0
      %s2057 = sshll.u32 [#allocation4], 4
      %s2058 = int_to_ptr.vmem [resolvable:$true] %s2057
      %s2059 = sshll.u32 %s10, 4
      %s2060 = int_to_ptr.hbm [resolvable:$true] %s2059
      %2062 = dma.vmem_to_hbm [thread:$0]  %s2058, 32, %s2060, [#allocation5]
    $region45: #{cnn_forward.1} parent=1 // pred_fallthru
      _
    // Predicated region
    $region46: #{cnn_forward.1} parent=1 // pred_check
      _
    $region47: #{cnn_forward.1} parent=1 // pred_check_branch
      %2064 = sbr.rel (0) target = $region49
    $region48: #{cnn_forward.1} parent=1 // pred_region
      %2066 = dma.done [#allocation5], 32
    $region49: #{cnn_forward.1} parent=1 // pred_fallthru
      _
    %2067 = vsyncpa [#allocation5], 1

</llo_original>
